<compile_context>
chip_gen: v5e
topology: v5e:2x2
jax: 0.10.0
libtpu: 0.0.40
codegen_flags: <defaults>
</compile_context>

<pallas_src>
import functools

import jax
import jax.numpy as jnp
import numpy as np
from jax import lax
from jax.experimental import pallas as pl
from jax.experimental.pallas import tpu as pltpu


# ----------------------------------------------------------------------------
# Fused Pallas kernel: conv stack -> LSTM -> last step -> Linear
# ----------------------------------------------------------------------------
def _fused_crnn_kernel(*refs, n_conv, K, stride, hidden, neg_slope):
    x_ref = refs[0]
    conv_refs = refs[1:1 + 2 * n_conv]
    wih_ref, whh_ref, bias_ref, wlin_ref, blin_ref, o_ref = refs[1 + 2 * n_conv:]

    B, L, _ = x_ref.shape
    H = hidden

    # Per-timestep input rows, channels-last: Python list of (B, C_in) blocks.
    blocks = [x_ref[:, p, :] for p in range(L)]

    # ---- Conv1d stack: out_t = leaky_relu(b + sum_j x_{t*stride+j} @ W_j) ----
    for layer in range(n_conv):
        w = conv_refs[2 * layer][...]        # (K*C_in, C_out); tap j = rows j*C_in:(j+1)*C_in
        b = conv_refs[2 * layer + 1][...]    # (1, C_out)
        C_in = blocks[0].shape[1]
        T_out = (len(blocks) - K) // stride + 1
        new_blocks = []
        for t in range(T_out):               # static unroll (T_out <= 7)
            acc = b
            for j in range(K):               # K static shifted taps, summed
                acc = acc + jnp.dot(blocks[t * stride + j],
                                    w[j * C_in:(j + 1) * C_in, :],
                                    preferred_element_type=jnp.float32)
            new_blocks.append(jnp.where(acc >= 0.0, acc, neg_slope * acc))
        blocks = new_blocks

    # `blocks` is now the time-major sequence (== permute([1, 0, 2]) in the module).
    T = len(blocks)

    # ---- LSTM: input projection hoisted out of the serial recurrence ----
    wih = wih_ref[...]                       # (D, 4H)
    whh = whh_ref[...]                       # (H, 4H)
    bias = bias_ref[...]                     # (1, 4H) == b_ih + b_hh (pre-folded)
    xproj = [jnp.dot(blocks[t], wih, preferred_element_type=jnp.float32) + bias
             for t in range(T)]

    h = jnp.zeros((B, H), jnp.float32)
    c = jnp.zeros((B, H), jnp.float32)
    for t in range(T):                       # fully unrolled, static T
        gates = xproj[t] + jnp.dot(h, whh, preferred_element_type=jnp.float32)
        sig = jax.nn.sigmoid(gates)          # one full-width EUP op
        tnh = jnp.tanh(gates)                # one full-width EUP op
        # PyTorch gate order: i, f, g, o
        c = sig[:, H:2 * H] * c + sig[:, 0:H] * tnh[:, 2 * H:3 * H]
        h = sig[:, 3 * H:4 * H] * jnp.tanh(c)

    # ---- x[-1, ...] -> nn.Linear ----
    o_ref[...] = (jnp.dot(h, wlin_ref[...], preferred_element_type=jnp.float32)
                  + blin_ref[...])


# ----------------------------------------------------------------------------
# Host-side one-time weight repacking (PyTorch layouts -> kernel layouts)
# ----------------------------------------------------------------------------
def pack_crnn_params(convs, w_ih, w_hh, b_ih, b_hh, w_lin, b_lin):
    packed_convs = []
    for (w, b) in convs:
        C_out, C_in, K = w.shape
        # row j*C_in + c holds w[:, c, j]  -> per-tap (C_in, C_out) blocks
        wp = jnp.transpose(w, (2, 1, 0)).reshape(K * C_in, C_out)
        packed_convs.append((wp, b.reshape(1, C_out)))
    H = w_hh.shape[1]
    wih_t = jnp.transpose(w_ih)                    # (D, 4H)
    whh_t = jnp.transpose(w_hh)                    # (H, 4H)
    bias = (b_ih + b_hh).reshape(1, 4 * H)         # fold the two LSTM biases
    wlin_t = jnp.transpose(w_lin)                  # (H, R)
    blin = b_lin.reshape(1, w_lin.shape[0])        # (1, R)
    return packed_convs, wih_t, whh_t, bias, wlin_t, blin


def crnn_forward(x, packed, *, k, stride, hidden, neg_slope=0.01):
    """x: (B, L, C_in) channels-last; packed = pack_crnn_params(...)."""
    convs, wih_t, whh_t, bias, wlin_t, blin = packed
    n_conv = len(convs)
    B = x.shape[0]
    R = wlin_t.shape[1]

    args = [x]
    for (w, b) in convs:
        args += [w, b]
    args += [wih_t, whh_t, bias, wlin_t, blin]

    def full(a):  # full-array block (satisfies the (8,128) rule via full dims)
        nd = a.ndim
        return pl.BlockSpec(a.shape, lambda i, _nd=nd: (0,) * _nd)

    kernel = functools.partial(_fused_crnn_kernel, n_conv=n_conv, K=k,
                               stride=stride, hidden=hidden,
                               neg_slope=neg_slope)
    return pl.pallas_call(
        kernel,
        grid=(1,),
        in_specs=[full(a) for a in args],
        out_specs=pl.BlockSpec((B, R), lambda i: (0, 0)),
        out_shape=jax.ShapeDtypeStruct((B, R), jnp.float32),
        compiler_params=pltpu.CompilerParams(
            dimension_semantics=("arbitrary",)),
    )(*args)


# ----------------------------------------------------------------------------
# Pure-JAX reference (for correctness check)
# ----------------------------------------------------------------------------
def _ref_conv(x_blc, w, b, stride, neg=0.01):
    B, L, C = x_blc.shape
    C_out, C_in, K = w.shape
    T = (L - K) // stride + 1
    idx = jnp.arange(T)[:, None] * stride + jnp.arange(K)[None, :]
    p = jnp.transpose(x_blc[:, idx, :], (0, 1, 3, 2)).reshape(B * T, C * K)
    y = p @ w.reshape(C_out, -1).T + b
    y = jnp.where(y >= 0.0, y, neg * y)
    return y.reshape(B, T, C_out)


def _ref_forward(x, convs, w_ih, w_hh, b_ih, b_hh, w_lin, b_lin, stride):
    h = x
    for (w, b) in convs:
        h = _ref_conv(h, w, b, stride)
    xs = jnp.transpose(h, (1, 0, 2))       # (T, B, D)
    T, B, D = xs.shape
    H = w_hh.shape[1]

    def step(carry, x_t):
        hh, cc = carry
        g = x_t @ w_ih.T + b_ih + hh @ w_hh.T + b_hh
        gi, gf, gg, go = jnp.split(g, 4, axis=-1)
        cc = jax.nn.sigmoid(gf) * cc + jax.nn.sigmoid(gi) * jnp.tanh(gg)
        hh = jax.nn.sigmoid(go) * jnp.tanh(cc)
        return (hh, cc), None

    (hh, _), _ = lax.scan(step, (jnp.zeros((B, H)), jnp.zeros((B, H))), xs)
    return hh @ w_lin.T + b_lin


# ----------------------------------------------------------------------------
if __name__ == "__main__":
    # Model config (see header comment)
    B, L = 2, 16
    c_in, c_hidden, c_out = 4, 32, 32
    c_k, c_stride, c_layers = 3, 2, 2
    r_in, r_hidden, r_out = c_out, 32, 8

    key = jax.random.PRNGKey(0)
    keys = jax.random.split(key, 16)

    def uni(k, shape, bound):
        return jax.random.uniform(k, shape, jnp.float32, -bound, bound)

    # Conv1d params, PyTorch layout (C_out, C_in, K)
    convs = []
    in_ch = c_in
    out_chs = [c_hidden] * (c_layers - 1) + [c_out]
    ki = 0
    for out_ch in out_chs:
        bnd = 1.0 / float(np.sqrt(in_ch * c_k))
        w = uni(keys[ki], (out_ch, in_ch, c_k), bnd); ki += 1
        b = uni(keys[ki], (out_ch,), bnd); ki += 1
        convs.append((w, b))
        in_ch = out_ch

    # LSTM params, PyTorch layout: weight_ih (4H, D), weight_hh (4H, H)
    bnd = 1.0 / float(np.sqrt(r_hidden))
    w_ih = uni(keys[ki], (4 * r_hidden, r_in), bnd); ki += 1
    w_hh = uni(keys[ki], (4 * r_hidden, r_hidden), bnd); ki += 1
    b_ih = uni(keys[ki], (4 * r_hidden,), bnd); ki += 1
    b_hh = uni(keys[ki], (4 * r_hidden,), bnd); ki += 1

    # Linear params, PyTorch layout: (r_out, r_hidden)
    w_lin = uni(keys[ki], (r_out, r_hidden), bnd); ki += 1
    b_lin = uni(keys[ki], (r_out,), bnd); ki += 1

    # Input: (batch, length, channels)
    x = jax.random.normal(keys[ki], (B, L, c_in), jnp.float32)

    packed = pack_crnn_params(convs, w_ih, w_hh, b_ih, b_hh, w_lin, b_lin)
    fwd = jax.jit(functools.partial(crnn_forward, k=c_k, stride=c_stride,
                                    hidden=r_hidden))
    out = jax.block_until_ready(fwd(x, packed))
    assert out.shape == (B, r_out), out.shape

    ref = jax.block_until_ready(
        _ref_forward(x, convs, w_ih, w_hh, b_ih, b_hh, w_lin, b_lin, c_stride))
    if not np.allclose(np.asarray(out), np.asarray(ref), rtol=2e-2, atol=2e-2):
        raise AssertionError(
            f"mismatch: max abs err "
            f"{np.max(np.abs(np.asarray(out) - np.asarray(ref)))}")

    print("KERNEL_OK")
</pallas_src>

<mosaic_0001>
module attributes {stable_mosaic.version = 11 : i64} {
  func.func @_fused_crnn_kernel(%arg0: i32, %arg1: memref<2x16x4xf32, #tpu.memory_space<vmem>>, %arg2: memref<12x32xf32, #tpu.memory_space<vmem>>, %arg3: memref<1x32xf32, #tpu.memory_space<vmem>>, %arg4: memref<96x32xf32, #tpu.memory_space<vmem>>, %arg5: memref<1x32xf32, #tpu.memory_space<vmem>>, %arg6: memref<32x128xf32, #tpu.memory_space<vmem>>, %arg7: memref<32x128xf32, #tpu.memory_space<vmem>>, %arg8: memref<1x128xf32, #tpu.memory_space<vmem>>, %arg9: memref<32x8xf32, #tpu.memory_space<vmem>>, %arg10: memref<1x8xf32, #tpu.memory_space<vmem>>, %arg11: memref<2x8xf32, #tpu.memory_space<vmem>>) attributes {dimension_semantics = [#tpu.dimension_semantics<arbitrary>], iteration_bounds = array<i64: 1>, scalar_prefetch = 0 : i64, scratch_operands = 0 : i64, tpu.core_type = #tpu.core_type<tc>, window_params = [{pipeline_mode = #tpu.pipeline_mode<synchronous>, transform_indices = @transform_0, window_bounds = array<i64: 2, 16, 4>}, {pipeline_mode = #tpu.pipeline_mode<synchronous>, transform_indices = @transform_1, window_bounds = array<i64: 12, 32>}, {pipeline_mode = #tpu.pipeline_mode<synchronous>, transform_indices = @transform_2, window_bounds = array<i64: 1, 32>}, {pipeline_mode = #tpu.pipeline_mode<synchronous>, transform_indices = @transform_3, window_bounds = array<i64: 96, 32>}, {pipeline_mode = #tpu.pipeline_mode<synchronous>, transform_indices = @transform_4, window_bounds = array<i64: 1, 32>}, {pipeline_mode = #tpu.pipeline_mode<synchronous>, transform_indices = @transform_5, window_bounds = array<i64: 32, 128>}, {pipeline_mode = #tpu.pipeline_mode<synchronous>, transform_indices = @transform_6, window_bounds = array<i64: 32, 128>}, {pipeline_mode = #tpu.pipeline_mode<synchronous>, transform_indices = @transform_7, window_bounds = array<i64: 1, 128>}, {pipeline_mode = #tpu.pipeline_mode<synchronous>, transform_indices = @transform_8, window_bounds = array<i64: 32, 8>}, {pipeline_mode = #tpu.pipeline_mode<synchronous>, transform_indices = @transform_9, window_bounds = array<i64: 1, 8>}, {pipeline_mode = #tpu.pipeline_mode<synchronous>, transform_indices = @transform_10, window_bounds = array<i64: 2, 8>}]} {
    %c0 = arith.constant 0 : index
    %c0_0 = arith.constant 0 : index
    %c0_1 = arith.constant 0 : index
    %0 = vector.load %arg1[%c0, %c0_0, %c0_1] : memref<2x16x4xf32, #tpu.memory_space<vmem>>, vector<2x1x4xf32>
    %1 = vector.shape_cast %0 : vector<2x1x4xf32> to vector<2x4xf32>
    %c0_2 = arith.constant 0 : index
    %c1 = arith.constant 1 : index
    %c0_3 = arith.constant 0 : index
    %2 = vector.load %arg1[%c0_2, %c1, %c0_3] : memref<2x16x4xf32, #tpu.memory_space<vmem>>, vector<2x1x4xf32>
    %3 = vector.shape_cast %2 : vector<2x1x4xf32> to vector<2x4xf32>
    %c0_4 = arith.constant 0 : index
    %c2 = arith.constant 2 : index
    %c0_5 = arith.constant 0 : index
    %4 = vector.load %arg1[%c0_4, %c2, %c0_5] : memref<2x16x4xf32, #tpu.memory_space<vmem>>, vector<2x1x4xf32>
    %5 = vector.shape_cast %4 : vector<2x1x4xf32> to vector<2x4xf32>
    %c0_6 = arith.constant 0 : index
    %c3 = arith.constant 3 : index
    %c0_7 = arith.constant 0 : index
    %6 = vector.load %arg1[%c0_6, %c3, %c0_7] : memref<2x16x4xf32, #tpu.memory_space<vmem>>, vector<2x1x4xf32>
    %7 = vector.shape_cast %6 : vector<2x1x4xf32> to vector<2x4xf32>
    %c0_8 = arith.constant 0 : index
    %c4 = arith.constant 4 : index
    %c0_9 = arith.constant 0 : index
    %8 = vector.load %arg1[%c0_8, %c4, %c0_9] : memref<2x16x4xf32, #tpu.memory_space<vmem>>, vector<2x1x4xf32>
    %9 = vector.shape_cast %8 : vector<2x1x4xf32> to vector<2x4xf32>
    %c0_10 = arith.constant 0 : index
    %c5 = arith.constant 5 : index
    %c0_11 = arith.constant 0 : index
    %10 = vector.load %arg1[%c0_10, %c5, %c0_11] : memref<2x16x4xf32, #tpu.memory_space<vmem>>, vector<2x1x4xf32>
    %11 = vector.shape_cast %10 : vector<2x1x4xf32> to vector<2x4xf32>
    %c0_12 = arith.constant 0 : index
    %c6 = arith.constant 6 : index
    %c0_13 = arith.constant 0 : index
    %12 = vector.load %arg1[%c0_12, %c6, %c0_13] : memref<2x16x4xf32, #tpu.memory_space<vmem>>, vector<2x1x4xf32>
    %13 = vector.shape_cast %12 : vector<2x1x4xf32> to vector<2x4xf32>
    %c0_14 = arith.constant 0 : index
    %c7 = arith.constant 7 : index
    %c0_15 = arith.constant 0 : index
    %14 = vector.load %arg1[%c0_14, %c7, %c0_15] : memref<2x16x4xf32, #tpu.memory_space<vmem>>, vector<2x1x4xf32>
    %15 = vector.shape_cast %14 : vector<2x1x4xf32> to vector<2x4xf32>
    %c0_16 = arith.constant 0 : index
    %c8 = arith.constant 8 : index
    %c0_17 = arith.constant 0 : index
    %16 = vector.load %arg1[%c0_16, %c8, %c0_17] : memref<2x16x4xf32, #tpu.memory_space<vmem>>, vector<2x1x4xf32>
    %17 = vector.shape_cast %16 : vector<2x1x4xf32> to vector<2x4xf32>
    %c0_18 = arith.constant 0 : index
    %c9 = arith.constant 9 : index
    %c0_19 = arith.constant 0 : index
    %18 = vector.load %arg1[%c0_18, %c9, %c0_19] : memref<2x16x4xf32, #tpu.memory_space<vmem>>, vector<2x1x4xf32>
    %19 = vector.shape_cast %18 : vector<2x1x4xf32> to vector<2x4xf32>
    %c0_20 = arith.constant 0 : index
    %c10 = arith.constant 10 : index
    %c0_21 = arith.constant 0 : index
    %20 = vector.load %arg1[%c0_20, %c10, %c0_21] : memref<2x16x4xf32, #tpu.memory_space<vmem>>, vector<2x1x4xf32>
    %21 = vector.shape_cast %20 : vector<2x1x4xf32> to vector<2x4xf32>
    %c0_22 = arith.constant 0 : index
    %c11 = arith.constant 11 : index
    %c0_23 = arith.constant 0 : index
    %22 = vector.load %arg1[%c0_22, %c11, %c0_23] : memref<2x16x4xf32, #tpu.memory_space<vmem>>, vector<2x1x4xf32>
    %23 = vector.shape_cast %22 : vector<2x1x4xf32> to vector<2x4xf32>
    %c0_24 = arith.constant 0 : index
    %c12 = arith.constant 12 : index
    %c0_25 = arith.constant 0 : index
    %24 = vector.load %arg1[%c0_24, %c12, %c0_25] : memref<2x16x4xf32, #tpu.memory_space<vmem>>, vector<2x1x4xf32>
    %25 = vector.shape_cast %24 : vector<2x1x4xf32> to vector<2x4xf32>
    %c0_26 = arith.constant 0 : index
    %c13 = arith.constant 13 : index
    %c0_27 = arith.constant 0 : index
    %26 = vector.load %arg1[%c0_26, %c13, %c0_27] : memref<2x16x4xf32, #tpu.memory_space<vmem>>, vector<2x1x4xf32>
    %27 = vector.shape_cast %26 : vector<2x1x4xf32> to vector<2x4xf32>
    %c0_28 = arith.constant 0 : index
    %c14 = arith.constant 14 : index
    %c0_29 = arith.constant 0 : index
    %28 = vector.load %arg1[%c0_28, %c14, %c0_29] : memref<2x16x4xf32, #tpu.memory_space<vmem>>, vector<2x1x4xf32>
    %29 = vector.shape_cast %28 : vector<2x1x4xf32> to vector<2x4xf32>
    %c0_30 = arith.constant 0 : index
    %c0_31 = arith.constant 0 : index
    %30 = vector.load %arg2[%c0_30, %c0_31] : memref<12x32xf32, #tpu.memory_space<vmem>>, vector<12x32xf32>
    %c0_32 = arith.constant 0 : index
    %c0_33 = arith.constant 0 : index
    %31 = vector.load %arg3[%c0_32, %c0_33] : memref<1x32xf32, #tpu.memory_space<vmem>>, vector<1x32xf32>
    %32 = vector.extract_strided_slice %30 {offsets = [0, 0], sizes = [4, 32], strides = [1, 1]} : vector<12x32xf32> to vector<4x32xf32>
    %cst = arith.constant dense<0.000000e+00> : vector<2x32xf32>
    %33 = tpu.matmul %1, %32, %cst {dimension_numbers = #tpu.dot_dimension_numbers<[1], [0], [0], [1], [0, 0, 1, 1], [], []>} : vector<2x4xf32>, vector<4x32xf32>, vector<2x32xf32> -> vector<2x32xf32>
    %34 = vector.broadcast %31 : vector<1x32xf32> to vector<2x32xf32>
    %35 = arith.addf %34, %33 : vector<2x32xf32>
    %36 = vector.extract_strided_slice %30 {offsets = [4, 0], sizes = [4, 32], strides = [1, 1]} : vector<12x32xf32> to vector<4x32xf32>
    %cst_34 = arith.constant dense<0.000000e+00> : vector<2x32xf32>
    %37 = tpu.matmul %3, %36, %cst_34 {dimension_numbers = #tpu.dot_dimension_numbers<[1], [0], [0], [1], [0, 0, 1, 1], [], []>} : vector<2x4xf32>, vector<4x32xf32>, vector<2x32xf32> -> vector<2x32xf32>
    %38 = arith.addf %35, %37 : vector<2x32xf32>
    %39 = vector.extract_strided_slice %30 {offsets = [8, 0], sizes = [4, 32], strides = [1, 1]} : vector<12x32xf32> to vector<4x32xf32>
    %cst_35 = arith.constant dense<0.000000e+00> : vector<2x32xf32>
    %40 = tpu.matmul %5, %39, %cst_35 {dimension_numbers = #tpu.dot_dimension_numbers<[1], [0], [0], [1], [0, 0, 1, 1], [], []>} : vector<2x4xf32>, vector<4x32xf32>, vector<2x32xf32> -> vector<2x32xf32>
    %41 = arith.addf %38, %40 : vector<2x32xf32>
    %cst_36 = arith.constant 0.000000e+00 : f32
    %42 = vector.broadcast %cst_36 : f32 to vector<2x32xf32>
    %43 = arith.cmpf oge, %41, %42 : vector<2x32xf32>
    %cst_37 = arith.constant 0.00999999977 : f32
    %44 = vector.broadcast %cst_37 : f32 to vector<2x32xf32>
    %45 = arith.mulf %44, %41 : vector<2x32xf32>
    %46 = arith.select %43, %41, %45 : vector<2x32xi1>, vector<2x32xf32>
    %47 = vector.extract_strided_slice %30 {offsets = [0, 0], sizes = [4, 32], strides = [1, 1]} : vector<12x32xf32> to vector<4x32xf32>
    %cst_38 = arith.constant dense<0.000000e+00> : vector<2x32xf32>
    %48 = tpu.matmul %5, %47, %cst_38 {dimension_numbers = #tpu.dot_dimension_numbers<[1], [0], [0], [1], [0, 0, 1, 1], [], []>} : vector<2x4xf32>, vector<4x32xf32>, vector<2x32xf32> -> vector<2x32xf32>
    %49 = vector.broadcast %31 : vector<1x32xf32> to vector<2x32xf32>
    %50 = arith.addf %49, %48 : vector<2x32xf32>
    %51 = vector.extract_strided_slice %30 {offsets = [4, 0], sizes = [4, 32], strides = [1, 1]} : vector<12x32xf32> to vector<4x32xf32>
    %cst_39 = arith.constant dense<0.000000e+00> : vector<2x32xf32>
    %52 = tpu.matmul %7, %51, %cst_39 {dimension_numbers = #tpu.dot_dimension_numbers<[1], [0], [0], [1], [0, 0, 1, 1], [], []>} : vector<2x4xf32>, vector<4x32xf32>, vector<2x32xf32> -> vector<2x32xf32>
    %53 = arith.addf %50, %52 : vector<2x32xf32>
    %54 = vector.extract_strided_slice %30 {offsets = [8, 0], sizes = [4, 32], strides = [1, 1]} : vector<12x32xf32> to vector<4x32xf32>
    %cst_40 = arith.constant dense<0.000000e+00> : vector<2x32xf32>
    %55 = tpu.matmul %9, %54, %cst_40 {dimension_numbers = #tpu.dot_dimension_numbers<[1], [0], [0], [1], [0, 0, 1, 1], [], []>} : vector<2x4xf32>, vector<4x32xf32>, vector<2x32xf32> -> vector<2x32xf32>
    %56 = arith.addf %53, %55 : vector<2x32xf32>
    %cst_41 = arith.constant 0.000000e+00 : f32
    %57 = vector.broadcast %cst_41 : f32 to vector<2x32xf32>
    %58 = arith.cmpf oge, %56, %57 : vector<2x32xf32>
    %cst_42 = arith.constant 0.00999999977 : f32
    %59 = vector.broadcast %cst_42 : f32 to vector<2x32xf32>
    %60 = arith.mulf %59, %56 : vector<2x32xf32>
    %61 = arith.select %58, %56, %60 : vector<2x32xi1>, vector<2x32xf32>
    %62 = vector.extract_strided_slice %30 {offsets = [0, 0], sizes = [4, 32], strides = [1, 1]} : vector<12x32xf32> to vector<4x32xf32>
    %cst_43 = arith.constant dense<0.000000e+00> : vector<2x32xf32>
    %63 = tpu.matmul %9, %62, %cst_43 {dimension_numbers = #tpu.dot_dimension_numbers<[1], [0], [0], [1], [0, 0, 1, 1], [], []>} : vector<2x4xf32>, vector<4x32xf32>, vector<2x32xf32> -> vector<2x32xf32>
    %64 = vector.broadcast %31 : vector<1x32xf32> to vector<2x32xf32>
    %65 = arith.addf %64, %63 : vector<2x32xf32>
    %66 = vector.extract_strided_slice %30 {offsets = [4, 0], sizes = [4, 32], strides = [1, 1]} : vector<12x32xf32> to vector<4x32xf32>
    %cst_44 = arith.constant dense<0.000000e+00> : vector<2x32xf32>
    %67 = tpu.matmul %11, %66, %cst_44 {dimension_numbers = #tpu.dot_dimension_numbers<[1], [0], [0], [1], [0, 0, 1, 1], [], []>} : vector<2x4xf32>, vector<4x32xf32>, vector<2x32xf32> -> vector<2x32xf32>
    %68 = arith.addf %65, %67 : vector<2x32xf32>
    %69 = vector.extract_strided_slice %30 {offsets = [8, 0], sizes = [4, 32], strides = [1, 1]} : vector<12x32xf32> to vector<4x32xf32>
    %cst_45 = arith.constant dense<0.000000e+00> : vector<2x32xf32>
    %70 = tpu.matmul %13, %69, %cst_45 {dimension_numbers = #tpu.dot_dimension_numbers<[1], [0], [0], [1], [0, 0, 1, 1], [], []>} : vector<2x4xf32>, vector<4x32xf32>, vector<2x32xf32> -> vector<2x32xf32>
    %71 = arith.addf %68, %70 : vector<2x32xf32>
    %cst_46 = arith.constant 0.000000e+00 : f32
    %72 = vector.broadcast %cst_46 : f32 to vector<2x32xf32>
    %73 = arith.cmpf oge, %71, %72 : vector<2x32xf32>
    %cst_47 = arith.constant 0.00999999977 : f32
    %74 = vector.broadcast %cst_47 : f32 to vector<2x32xf32>
    %75 = arith.mulf %74, %71 : vector<2x32xf32>
    %76 = arith.select %73, %71, %75 : vector<2x32xi1>, vector<2x32xf32>
    %77 = vector.extract_strided_slice %30 {offsets = [0, 0], sizes = [4, 32], strides = [1, 1]} : vector<12x32xf32> to vector<4x32xf32>
    %cst_48 = arith.constant dense<0.000000e+00> : vector<2x32xf32>
    %78 = tpu.matmul %13, %77, %cst_48 {dimension_numbers = #tpu.dot_dimension_numbers<[1], [0], [0], [1], [0, 0, 1, 1], [], []>} : vector<2x4xf32>, vector<4x32xf32>, vector<2x32xf32> -> vector<2x32xf32>
    %79 = vector.broadcast %31 : vector<1x32xf32> to vector<2x32xf32>
    %80 = arith.addf %79, %78 : vector<2x32xf32>
    %81 = vector.extract_strided_slice %30 {offsets = [4, 0], sizes = [4, 32], strides = [1, 1]} : vector<12x32xf32> to vector<4x32xf32>
    %cst_49 = arith.constant dense<0.000000e+00> : vector<2x32xf32>
    %82 = tpu.matmul %15, %81, %cst_49 {dimension_numbers = #tpu.dot_dimension_numbers<[1], [0], [0], [1], [0, 0, 1, 1], [], []>} : vector<2x4xf32>, vector<4x32xf32>, vector<2x32xf32> -> vector<2x32xf32>
    %83 = arith.addf %80, %82 : vector<2x32xf32>
    %84 = vector.extract_strided_slice %30 {offsets = [8, 0], sizes = [4, 32], strides = [1, 1]} : vector<12x32xf32> to vector<4x32xf32>
    %cst_50 = arith.constant dense<0.000000e+00> : vector<2x32xf32>
    %85 = tpu.matmul %17, %84, %cst_50 {dimension_numbers = #tpu.dot_dimension_numbers<[1], [0], [0], [1], [0, 0, 1, 1], [], []>} : vector<2x4xf32>, vector<4x32xf32>, vector<2x32xf32> -> vector<2x32xf32>
    %86 = arith.addf %83, %85 : vector<2x32xf32>
    %cst_51 = arith.constant 0.000000e+00 : f32
    %87 = vector.broadcast %cst_51 : f32 to vector<2x32xf32>
    %88 = arith.cmpf oge, %86, %87 : vector<2x32xf32>
    %cst_52 = arith.constant 0.00999999977 : f32
    %89 = vector.broadcast %cst_52 : f32 to vector<2x32xf32>
    %90 = arith.mulf %89, %86 : vector<2x32xf32>
    %91 = arith.select %88, %86, %90 : vector<2x32xi1>, vector<2x32xf32>
    %92 = vector.extract_strided_slice %30 {offsets = [0, 0], sizes = [4, 32], strides = [1, 1]} : vector<12x32xf32> to vector<4x32xf32>
    %cst_53 = arith.constant dense<0.000000e+00> : vector<2x32xf32>
    %93 = tpu.matmul %17, %92, %cst_53 {dimension_numbers = #tpu.dot_dimension_numbers<[1], [0], [0], [1], [0, 0, 1, 1], [], []>} : vector<2x4xf32>, vector<4x32xf32>, vector<2x32xf32> -> vector<2x32xf32>
    %94 = vector.broadcast %31 : vector<1x32xf32> to vector<2x32xf32>
    %95 = arith.addf %94, %93 : vector<2x32xf32>
    %96 = vector.extract_strided_slice %30 {offsets = [4, 0], sizes = [4, 32], strides = [1, 1]} : vector<12x32xf32> to vector<4x32xf32>
    %cst_54 = arith.constant dense<0.000000e+00> : vector<2x32xf32>
    %97 = tpu.matmul %19, %96, %cst_54 {dimension_numbers = #tpu.dot_dimension_numbers<[1], [0], [0], [1], [0, 0, 1, 1], [], []>} : vector<2x4xf32>, vector<4x32xf32>, vector<2x32xf32> -> vector<2x32xf32>
    %98 = arith.addf %95, %97 : vector<2x32xf32>
    %99 = vector.extract_strided_slice %30 {offsets = [8, 0], sizes = [4, 32], strides = [1, 1]} : vector<12x32xf32> to vector<4x32xf32>
    %cst_55 = arith.constant dense<0.000000e+00> : vector<2x32xf32>
    %100 = tpu.matmul %21, %99, %cst_55 {dimension_numbers = #tpu.dot_dimension_numbers<[1], [0], [0], [1], [0, 0, 1, 1], [], []>} : vector<2x4xf32>, vector<4x32xf32>, vector<2x32xf32> -> vector<2x32xf32>
    %101 = arith.addf %98, %100 : vector<2x32xf32>
    %cst_56 = arith.constant 0.000000e+00 : f32
    %102 = vector.broadcast %cst_56 : f32 to vector<2x32xf32>
    %103 = arith.cmpf oge, %101, %102 : vector<2x32xf32>
    %cst_57 = arith.constant 0.00999999977 : f32
    %104 = vector.broadcast %cst_57 : f32 to vector<2x32xf32>
    %105 = arith.mulf %104, %101 : vector<2x32xf32>
    %106 = arith.select %103, %101, %105 : vector<2x32xi1>, vector<2x32xf32>
    %107 = vector.extract_strided_slice %30 {offsets = [0, 0], sizes = [4, 32], strides = [1, 1]} : vector<12x32xf32> to vector<4x32xf32>
    %cst_58 = arith.constant dense<0.000000e+00> : vector<2x32xf32>
    %108 = tpu.matmul %21, %107, %cst_58 {dimension_numbers = #tpu.dot_dimension_numbers<[1], [0], [0], [1], [0, 0, 1, 1], [], []>} : vector<2x4xf32>, vector<4x32xf32>, vector<2x32xf32> -> vector<2x32xf32>
    %109 = vector.broadcast %31 : vector<1x32xf32> to vector<2x32xf32>
    %110 = arith.addf %109, %108 : vector<2x32xf32>
    %111 = vector.extract_strided_slice %30 {offsets = [4, 0], sizes = [4, 32], strides = [1, 1]} : vector<12x32xf32> to vector<4x32xf32>
    %cst_59 = arith.constant dense<0.000000e+00> : vector<2x32xf32>
    %112 = tpu.matmul %23, %111, %cst_59 {dimension_numbers = #tpu.dot_dimension_numbers<[1], [0], [0], [1], [0, 0, 1, 1], [], []>} : vector<2x4xf32>, vector<4x32xf32>, vector<2x32xf32> -> vector<2x32xf32>
    %113 = arith.addf %110, %112 : vector<2x32xf32>
    %114 = vector.extract_strided_slice %30 {offsets = [8, 0], sizes = [4, 32], strides = [1, 1]} : vector<12x32xf32> to vector<4x32xf32>
    %cst_60 = arith.constant dense<0.000000e+00> : vector<2x32xf32>
    %115 = tpu.matmul %25, %114, %cst_60 {dimension_numbers = #tpu.dot_dimension_numbers<[1], [0], [0], [1], [0, 0, 1, 1], [], []>} : vector<2x4xf32>, vector<4x32xf32>, vector<2x32xf32> -> vector<2x32xf32>
    %116 = arith.addf %113, %115 : vector<2x32xf32>
    %cst_61 = arith.constant 0.000000e+00 : f32
    %117 = vector.broadcast %cst_61 : f32 to vector<2x32xf32>
    %118 = arith.cmpf oge, %116, %117 : vector<2x32xf32>
    %cst_62 = arith.constant 0.00999999977 : f32
    %119 = vector.broadcast %cst_62 : f32 to vector<2x32xf32>
    %120 = arith.mulf %119, %116 : vector<2x32xf32>
    %121 = arith.select %118, %116, %120 : vector<2x32xi1>, vector<2x32xf32>
    %122 = vector.extract_strided_slice %30 {offsets = [0, 0], sizes = [4, 32], strides = [1, 1]} : vector<12x32xf32> to vector<4x32xf32>
    %cst_63 = arith.constant dense<0.000000e+00> : vector<2x32xf32>
    %123 = tpu.matmul %25, %122, %cst_63 {dimension_numbers = #tpu.dot_dimension_numbers<[1], [0], [0], [1], [0, 0, 1, 1], [], []>} : vector<2x4xf32>, vector<4x32xf32>, vector<2x32xf32> -> vector<2x32xf32>
    %124 = vector.broadcast %31 : vector<1x32xf32> to vector<2x32xf32>
    %125 = arith.addf %124, %123 : vector<2x32xf32>
    %126 = vector.extract_strided_slice %30 {offsets = [4, 0], sizes = [4, 32], strides = [1, 1]} : vector<12x32xf32> to vector<4x32xf32>
    %cst_64 = arith.constant dense<0.000000e+00> : vector<2x32xf32>
    %127 = tpu.matmul %27, %126, %cst_64 {dimension_numbers = #tpu.dot_dimension_numbers<[1], [0], [0], [1], [0, 0, 1, 1], [], []>} : vector<2x4xf32>, vector<4x32xf32>, vector<2x32xf32> -> vector<2x32xf32>
    %128 = arith.addf %125, %127 : vector<2x32xf32>
    %129 = vector.extract_strided_slice %30 {offsets = [8, 0], sizes = [4, 32], strides = [1, 1]} : vector<12x32xf32> to vector<4x32xf32>
    %cst_65 = arith.constant dense<0.000000e+00> : vector<2x32xf32>
    %130 = tpu.matmul %29, %129, %cst_65 {dimension_numbers = #tpu.dot_dimension_numbers<[1], [0], [0], [1], [0, 0, 1, 1], [], []>} : vector<2x4xf32>, vector<4x32xf32>, vector<2x32xf32> -> vector<2x32xf32>
    %131 = arith.addf %128, %130 : vector<2x32xf32>
    %cst_66 = arith.constant 0.000000e+00 : f32
    %132 = vector.broadcast %cst_66 : f32 to vector<2x32xf32>
    %133 = arith.cmpf oge, %131, %132 : vector<2x32xf32>
    %cst_67 = arith.constant 0.00999999977 : f32
    %134 = vector.broadcast %cst_67 : f32 to vector<2x32xf32>
    %135 = arith.mulf %134, %131 : vector<2x32xf32>
    %136 = arith.select %133, %131, %135 : vector<2x32xi1>, vector<2x32xf32>
    %c0_68 = arith.constant 0 : index
    %c0_69 = arith.constant 0 : index
    %137 = vector.load %arg4[%c0_68, %c0_69] : memref<96x32xf32, #tpu.memory_space<vmem>>, vector<96x32xf32>
    %c0_70 = arith.constant 0 : index
    %c0_71 = arith.constant 0 : index
    %138 = vector.load %arg5[%c0_70, %c0_71] : memref<1x32xf32, #tpu.memory_space<vmem>>, vector<1x32xf32>
    %139 = vector.extract_strided_slice %137 {offsets = [0, 0], sizes = [32, 32], strides = [1, 1]} : vector<96x32xf32> to vector<32x32xf32>
    %cst_72 = arith.constant dense<0.000000e+00> : vector<2x32xf32>
    %140 = tpu.matmul %46, %139, %cst_72 {dimension_numbers = #tpu.dot_dimension_numbers<[1], [0], [0], [1], [0, 0, 1, 1], [], []>} : vector<2x32xf32>, vector<32x32xf32>, vector<2x32xf32> -> vector<2x32xf32>
    %141 = vector.broadcast %138 : vector<1x32xf32> to vector<2x32xf32>
    %142 = arith.addf %141, %140 : vector<2x32xf32>
    %143 = vector.extract_strided_slice %137 {offsets = [32, 0], sizes = [32, 32], strides = [1, 1]} : vector<96x32xf32> to vector<32x32xf32>
    %cst_73 = arith.constant dense<0.000000e+00> : vector<2x32xf32>
    %144 = tpu.matmul %61, %143, %cst_73 {dimension_numbers = #tpu.dot_dimension_numbers<[1], [0], [0], [1], [0, 0, 1, 1], [], []>} : vector<2x32xf32>, vector<32x32xf32>, vector<2x32xf32> -> vector<2x32xf32>
    %145 = arith.addf %142, %144 : vector<2x32xf32>
    %146 = vector.extract_strided_slice %137 {offsets = [64, 0], sizes = [32, 32], strides = [1, 1]} : vector<96x32xf32> to vector<32x32xf32>
    %cst_74 = arith.constant dense<0.000000e+00> : vector<2x32xf32>
    %147 = tpu.matmul %76, %146, %cst_74 {dimension_numbers = #tpu.dot_dimension_numbers<[1], [0], [0], [1], [0, 0, 1, 1], [], []>} : vector<2x32xf32>, vector<32x32xf32>, vector<2x32xf32> -> vector<2x32xf32>
    %148 = arith.addf %145, %147 : vector<2x32xf32>
    %cst_75 = arith.constant 0.000000e+00 : f32
    %149 = vector.broadcast %cst_75 : f32 to vector<2x32xf32>
    %150 = arith.cmpf oge, %148, %149 : vector<2x32xf32>
    %cst_76 = arith.constant 0.00999999977 : f32
    %151 = vector.broadcast %cst_76 : f32 to vector<2x32xf32>
    %152 = arith.mulf %151, %148 : vector<2x32xf32>
    %153 = arith.select %150, %148, %152 : vector<2x32xi1>, vector<2x32xf32>
    %154 = vector.extract_strided_slice %137 {offsets = [0, 0], sizes = [32, 32], strides = [1, 1]} : vector<96x32xf32> to vector<32x32xf32>
    %cst_77 = arith.constant dense<0.000000e+00> : vector<2x32xf32>
    %155 = tpu.matmul %76, %154, %cst_77 {dimension_numbers = #tpu.dot_dimension_numbers<[1], [0], [0], [1], [0, 0, 1, 1], [], []>} : vector<2x32xf32>, vector<32x32xf32>, vector<2x32xf32> -> vector<2x32xf32>
    %156 = vector.broadcast %138 : vector<1x32xf32> to vector<2x32xf32>
    %157 = arith.addf %156, %155 : vector<2x32xf32>
    %158 = vector.extract_strided_slice %137 {offsets = [32, 0], sizes = [32, 32], strides = [1, 1]} : vector<96x32xf32> to vector<32x32xf32>
    %cst_78 = arith.constant dense<0.000000e+00> : vector<2x32xf32>
    %159 = tpu.matmul %91, %158, %cst_78 {dimension_numbers = #tpu.dot_dimension_numbers<[1], [0], [0], [1], [0, 0, 1, 1], [], []>} : vector<2x32xf32>, vector<32x32xf32>, vector<2x32xf32> -> vector<2x32xf32>
    %160 = arith.addf %157, %159 : vector<2x32xf32>
    %161 = vector.extract_strided_slice %137 {offsets = [64, 0], sizes = [32, 32], strides = [1, 1]} : vector<96x32xf32> to vector<32x32xf32>
    %cst_79 = arith.constant dense<0.000000e+00> : vector<2x32xf32>
    %162 = tpu.matmul %106, %161, %cst_79 {dimension_numbers = #tpu.dot_dimension_numbers<[1], [0], [0], [1], [0, 0, 1, 1], [], []>} : vector<2x32xf32>, vector<32x32xf32>, vector<2x32xf32> -> vector<2x32xf32>
    %163 = arith.addf %160, %162 : vector<2x32xf32>
    %cst_80 = arith.constant 0.000000e+00 : f32
    %164 = vector.broadcast %cst_80 : f32 to vector<2x32xf32>
    %165 = arith.cmpf oge, %163, %164 : vector<2x32xf32>
    %cst_81 = arith.constant 0.00999999977 : f32
    %166 = vector.broadcast %cst_81 : f32 to vector<2x32xf32>
    %167 = arith.mulf %166, %163 : vector<2x32xf32>
    %168 = arith.select %165, %163, %167 : vector<2x32xi1>, vector<2x32xf32>
    %169 = vector.extract_strided_slice %137 {offsets = [0, 0], sizes = [32, 32], strides = [1, 1]} : vector<96x32xf32> to vector<32x32xf32>
    %cst_82 = arith.constant dense<0.000000e+00> : vector<2x32xf32>
    %170 = tpu.matmul %106, %169, %cst_82 {dimension_numbers = #tpu.dot_dimension_numbers<[1], [0], [0], [1], [0, 0, 1, 1], [], []>} : vector<2x32xf32>, vector<32x32xf32>, vector<2x32xf32> -> vector<2x32xf32>
    %171 = vector.broadcast %138 : vector<1x32xf32> to vector<2x32xf32>
    %172 = arith.addf %171, %170 : vector<2x32xf32>
    %173 = vector.extract_strided_slice %137 {offsets = [32, 0], sizes = [32, 32], strides = [1, 1]} : vector<96x32xf32> to vector<32x32xf32>
    %cst_83 = arith.constant dense<0.000000e+00> : vector<2x32xf32>
    %174 = tpu.matmul %121, %173, %cst_83 {dimension_numbers = #tpu.dot_dimension_numbers<[1], [0], [0], [1], [0, 0, 1, 1], [], []>} : vector<2x32xf32>, vector<32x32xf32>, vector<2x32xf32> -> vector<2x32xf32>
    %175 = arith.addf %172, %174 : vector<2x32xf32>
    %176 = vector.extract_strided_slice %137 {offsets = [64, 0], sizes = [32, 32], strides = [1, 1]} : vector<96x32xf32> to vector<32x32xf32>
    %cst_84 = arith.constant dense<0.000000e+00> : vector<2x32xf32>
    %177 = tpu.matmul %136, %176, %cst_84 {dimension_numbers = #tpu.dot_dimension_numbers<[1], [0], [0], [1], [0, 0, 1, 1], [], []>} : vector<2x32xf32>, vector<32x32xf32>, vector<2x32xf32> -> vector<2x32xf32>
    %178 = arith.addf %175, %177 : vector<2x32xf32>
    %cst_85 = arith.constant 0.000000e+00 : f32
    %179 = vector.broadcast %cst_85 : f32 to vector<2x32xf32>
    %180 = arith.cmpf oge, %178, %179 : vector<2x32xf32>
    %cst_86 = arith.constant 0.00999999977 : f32
    %181 = vector.broadcast %cst_86 : f32 to vector<2x32xf32>
    %182 = arith.mulf %181, %178 : vector<2x32xf32>
    %183 = arith.select %180, %178, %182 : vector<2x32xi1>, vector<2x32xf32>
    %c0_87 = arith.constant 0 : index
    %c0_88 = arith.constant 0 : index
    %184 = vector.load %arg6[%c0_87, %c0_88] : memref<32x128xf32, #tpu.memory_space<vmem>>, vector<32x128xf32>
    %c0_89 = arith.constant 0 : index
    %c0_90 = arith.constant 0 : index
    %185 = vector.load %arg7[%c0_89, %c0_90] : memref<32x128xf32, #tpu.memory_space<vmem>>, vector<32x128xf32>
    %c0_91 = arith.constant 0 : index
    %c0_92 = arith.constant 0 : index
    %186 = vector.load %arg8[%c0_91, %c0_92] : memref<1x128xf32, #tpu.memory_space<vmem>>, vector<1x128xf32>
    %cst_93 = arith.constant dense<0.000000e+00> : vector<2x128xf32>
    %187 = tpu.matmul %153, %184, %cst_93 {dimension_numbers = #tpu.dot_dimension_numbers<[1], [0], [0], [1], [0, 0, 1, 1], [], []>} : vector<2x32xf32>, vector<32x128xf32>, vector<2x128xf32> -> vector<2x128xf32>
    %188 = vector.broadcast %186 : vector<1x128xf32> to vector<2x128xf32>
    %189 = arith.addf %187, %188 : vector<2x128xf32>
    %cst_94 = arith.constant dense<0.000000e+00> : vector<2x128xf32>
    %190 = tpu.matmul %168, %184, %cst_94 {dimension_numbers = #tpu.dot_dimension_numbers<[1], [0], [0], [1], [0, 0, 1, 1], [], []>} : vector<2x32xf32>, vector<32x128xf32>, vector<2x128xf32> -> vector<2x128xf32>
    %191 = vector.broadcast %186 : vector<1x128xf32> to vector<2x128xf32>
    %192 = arith.addf %190, %191 : vector<2x128xf32>
    %cst_95 = arith.constant dense<0.000000e+00> : vector<2x128xf32>
    %193 = tpu.matmul %183, %184, %cst_95 {dimension_numbers = #tpu.dot_dimension_numbers<[1], [0], [0], [1], [0, 0, 1, 1], [], []>} : vector<2x32xf32>, vector<32x128xf32>, vector<2x128xf32> -> vector<2x128xf32>
    %194 = vector.broadcast %186 : vector<1x128xf32> to vector<2x128xf32>
    %195 = arith.addf %193, %194 : vector<2x128xf32>
    %cst_96 = arith.constant 0.000000e+00 : f32
    %196 = vector.broadcast %cst_96 : f32 to vector<2x32xf32>
    %cst_97 = arith.constant 0.000000e+00 : f32
    %197 = vector.broadcast %cst_97 : f32 to vector<2x32xf32>
    %cst_98 = arith.constant dense<0.000000e+00> : vector<2x128xf32>
    %198 = tpu.matmul %196, %185, %cst_98 {dimension_numbers = #tpu.dot_dimension_numbers<[1], [0], [0], [1], [0, 0, 1, 1], [], []>} : vector<2x32xf32>, vector<32x128xf32>, vector<2x128xf32> -> vector<2x128xf32>
    %199 = arith.addf %189, %198 : vector<2x128xf32>
    %200 = arith.negf %199 : vector<2x128xf32>
    %201 = math.exp %200 : vector<2x128xf32>
    %cst_99 = arith.constant 1.000000e+00 : f32
    %202 = vector.broadcast %cst_99 : f32 to vector<2x128xf32>
    %203 = arith.addf %202, %201 : vector<2x128xf32>
    %204 = arith.divf %202, %203 : vector<2x128xf32>
    %205 = math.tanh %199 : vector<2x128xf32>
    %206 = vector.extract_strided_slice %204 {offsets = [0, 32], sizes = [2, 32], strides = [1, 1]} : vector<2x128xf32> to vector<2x32xf32>
    %207 = arith.mulf %206, %197 : vector<2x32xf32>
    %208 = vector.extract_strided_slice %204 {offsets = [0, 0], sizes = [2, 32], strides = [1, 1]} : vector<2x128xf32> to vector<2x32xf32>
    %209 = vector.extract_strided_slice %205 {offsets = [0, 64], sizes = [2, 32], strides = [1, 1]} : vector<2x128xf32> to vector<2x32xf32>
    %210 = arith.mulf %208, %209 : vector<2x32xf32>
    %211 = arith.addf %207, %210 : vector<2x32xf32>
    %212 = vector.extract_strided_slice %204 {offsets = [0, 96], sizes = [2, 32], strides = [1, 1]} : vector<2x128xf32> to vector<2x32xf32>
    %213 = math.tanh %211 : vector<2x32xf32>
    %214 = arith.mulf %212, %213 : vector<2x32xf32>
    %cst_100 = arith.constant dense<0.000000e+00> : vector<2x128xf32>
    %215 = tpu.matmul %214, %185, %cst_100 {dimension_numbers = #tpu.dot_dimension_numbers<[1], [0], [0], [1], [0, 0, 1, 1], [], []>} : vector<2x32xf32>, vector<32x128xf32>, vector<2x128xf32> -> vector<2x128xf32>
    %216 = arith.addf %192, %215 : vector<2x128xf32>
    %217 = arith.negf %216 : vector<2x128xf32>
    %218 = math.exp %217 : vector<2x128xf32>
    %cst_101 = arith.constant 1.000000e+00 : f32
    %219 = vector.broadcast %cst_101 : f32 to vector<2x128xf32>
    %220 = arith.addf %219, %218 : vector<2x128xf32>
    %221 = arith.divf %219, %220 : vector<2x128xf32>
    %222 = math.tanh %216 : vector<2x128xf32>
    %223 = vector.extract_strided_slice %221 {offsets = [0, 32], sizes = [2, 32], strides = [1, 1]} : vector<2x128xf32> to vector<2x32xf32>
    %224 = arith.mulf %223, %211 : vector<2x32xf32>
    %225 = vector.extract_strided_slice %221 {offsets = [0, 0], sizes = [2, 32], strides = [1, 1]} : vector<2x128xf32> to vector<2x32xf32>
    %226 = vector.extract_strided_slice %222 {offsets = [0, 64], sizes = [2, 32], strides = [1, 1]} : vector<2x128xf32> to vector<2x32xf32>
    %227 = arith.mulf %225, %226 : vector<2x32xf32>
    %228 = arith.addf %224, %227 : vector<2x32xf32>
    %229 = vector.extract_strided_slice %221 {offsets = [0, 96], sizes = [2, 32], strides = [1, 1]} : vector<2x128xf32> to vector<2x32xf32>
    %230 = math.tanh %228 : vector<2x32xf32>
    %231 = arith.mulf %229, %230 : vector<2x32xf32>
    %cst_102 = arith.constant dense<0.000000e+00> : vector<2x128xf32>
    %232 = tpu.matmul %231, %185, %cst_102 {dimension_numbers = #tpu.dot_dimension_numbers<[1], [0], [0], [1], [0, 0, 1, 1], [], []>} : vector<2x32xf32>, vector<32x128xf32>, vector<2x128xf32> -> vector<2x128xf32>
    %233 = arith.addf %195, %232 : vector<2x128xf32>
    %234 = arith.negf %233 : vector<2x128xf32>
    %235 = math.exp %234 : vector<2x128xf32>
    %cst_103 = arith.constant 1.000000e+00 : f32
    %236 = vector.broadcast %cst_103 : f32 to vector<2x128xf32>
    %237 = arith.addf %236, %235 : vector<2x128xf32>
    %238 = arith.divf %236, %237 : vector<2x128xf32>
    %239 = math.tanh %233 : vector<2x128xf32>
    %240 = vector.extract_strided_slice %238 {offsets = [0, 32], sizes = [2, 32], strides = [1, 1]} : vector<2x128xf32> to vector<2x32xf32>
    %241 = arith.mulf %240, %228 : vector<2x32xf32>
    %242 = vector.extract_strided_slice %238 {offsets = [0, 0], sizes = [2, 32], strides = [1, 1]} : vector<2x128xf32> to vector<2x32xf32>
    %243 = vector.extract_strided_slice %239 {offsets = [0, 64], sizes = [2, 32], strides = [1, 1]} : vector<2x128xf32> to vector<2x32xf32>
    %244 = arith.mulf %242, %243 : vector<2x32xf32>
    %245 = arith.addf %241, %244 : vector<2x32xf32>
    %246 = vector.extract_strided_slice %238 {offsets = [0, 96], sizes = [2, 32], strides = [1, 1]} : vector<2x128xf32> to vector<2x32xf32>
    %247 = math.tanh %245 : vector<2x32xf32>
    %248 = arith.mulf %246, %247 : vector<2x32xf32>
    %c0_104 = arith.constant 0 : index
    %c0_105 = arith.constant 0 : index
    %249 = vector.load %arg9[%c0_104, %c0_105] : memref<32x8xf32, #tpu.memory_space<vmem>>, vector<32x8xf32>
    %cst_106 = arith.constant dense<0.000000e+00> : vector<2x8xf32>
    %250 = tpu.matmul %248, %249, %cst_106 {dimension_numbers = #tpu.dot_dimension_numbers<[1], [0], [0], [1], [0, 0, 1, 1], [], []>} : vector<2x32xf32>, vector<32x8xf32>, vector<2x8xf32> -> vector<2x8xf32>
    %c0_107 = arith.constant 0 : index
    %c0_108 = arith.constant 0 : index
    %251 = vector.load %arg10[%c0_107, %c0_108] : memref<1x8xf32, #tpu.memory_space<vmem>>, vector<1x8xf32>
    %252 = vector.broadcast %251 : vector<1x8xf32> to vector<2x8xf32>
    %253 = arith.addf %250, %252 : vector<2x8xf32>
    %c0_109 = arith.constant 0 : index
    %c0_110 = arith.constant 0 : index
    %254 = vector.load %arg11[%c0_109, %c0_110] : memref<2x8xf32, #tpu.memory_space<vmem>>, vector<2x8xf32>
    tpu.vector_store %arg11[%c0_109, %c0_110], %253 {strides = array<i32>} : memref<2x8xf32, #tpu.memory_space<vmem>>, vector<2x8xf32>,
    return
  }
  func.func @transform_0(%arg0: i32) -> (i32, i32, i32) {
    %c0_i32 = arith.constant 0 : i32
    %c0_i32_0 = arith.constant 0 : i32
    %c0_i32_1 = arith.constant 0 : i32
    %c0_i32_2 = arith.constant 0 : i32
    return %c0_i32, %c0_i32_0, %c0_i32_1 : i32, i32, i32
  }
  func.func @transform_1(%arg0: i32) -> (i32, i32) {
    %c0_i32 = arith.constant 0 : i32
    %c0_i32_0 = arith.constant 0 : i32
    %c0_i32_1 = arith.constant 0 : i32
    return %c0_i32, %c0_i32_0 : i32, i32
  }
  func.func @transform_2(%arg0: i32) -> (i32, i32) {
    %c0_i32 = arith.constant 0 : i32
    %c0_i32_0 = arith.constant 0 : i32
    %c0_i32_1 = arith.constant 0 : i32
    return %c0_i32, %c0_i32_0 : i32, i32
  }
  func.func @transform_3(%arg0: i32) -> (i32, i32) {
    %c0_i32 = arith.constant 0 : i32
    %c0_i32_0 = arith.constant 0 : i32
    %c0_i32_1 = arith.constant 0 : i32
    return %c0_i32, %c0_i32_0 : i32, i32
  }
  func.func @transform_4(%arg0: i32) -> (i32, i32) {
    %c0_i32 = arith.constant 0 : i32
    %c0_i32_0 = arith.constant 0 : i32
    %c0_i32_1 = arith.constant 0 : i32
    return %c0_i32, %c0_i32_0 : i32, i32
  }
  func.func @transform_5(%arg0: i32) -> (i32, i32) {
    %c0_i32 = arith.constant 0 : i32
    %c0_i32_0 = arith.constant 0 : i32
    %c0_i32_1 = arith.constant 0 : i32
    return %c0_i32, %c0_i32_0 : i32, i32
  }
  func.func @transform_6(%arg0: i32) -> (i32, i32) {
    %c0_i32 = arith.constant 0 : i32
    %c0_i32_0 = arith.constant 0 : i32
    %c0_i32_1 = arith.constant 0 : i32
    return %c0_i32, %c0_i32_0 : i32, i32
  }
  func.func @transform_7(%arg0: i32) -> (i32, i32) {
    %c0_i32 = arith.constant 0 : i32
    %c0_i32_0 = arith.constant 0 : i32
    %c0_i32_1 = arith.constant 0 : i32
    return %c0_i32, %c0_i32_0 : i32, i32
  }
  func.func @transform_8(%arg0: i32) -> (i32, i32) {
    %c0_i32 = arith.constant 0 : i32
    %c0_i32_0 = arith.constant 0 : i32
    %c0_i32_1 = arith.constant 0 : i32
    return %c0_i32, %c0_i32_0 : i32, i32
  }
  func.func @transform_9(%arg0: i32) -> (i32, i32) {
    %c0_i32 = arith.constant 0 : i32
    %c0_i32_0 = arith.constant 0 : i32
    %c0_i32_1 = arith.constant 0 : i32
    return %c0_i32, %c0_i32_0 : i32, i32
  }
  func.func @transform_10(%arg0: i32) -> (i32, i32) {
    %c0_i32 = arith.constant 0 : i32
    %c0_i32_0 = arith.constant 0 : i32
    %c0_i32_1 = arith.constant 0 : i32
    return %c0_i32, %c0_i32_0 : i32, i32
  }
}

</mosaic_0001>

<llo_original>
// kernel: crnn_forward.1
$region0: #{crnn_forward.1}
  #allocation0 [shape = 'u32[]', space=smem, size = 0x4, offset = 0x4, fixed_abs, tag = 'smem constant byte address 0x4 - core index']
  #allocation1 [shape = 'u32[72,128]{1,0:T(1,128)}', space=vmem, size = 0x9000, scoped, tag = 'internal scratch']
  %s0 = inlined_call_operand.vmem [shape: f32[2,16,4], index: 0, kind: input, shape index: {}]
  %s1 = inlined_call_operand.vmem [shape: f32[12,32], index: 1, kind: input, shape index: {}]
  %s2 = inlined_call_operand.vmem [shape: f32[1,32], index: 2, kind: input, shape index: {}]
  %s3 = inlined_call_operand.vmem [shape: f32[96,32], index: 3, kind: input, shape index: {}]
  %s4 = inlined_call_operand.vmem [shape: f32[1,32], index: 4, kind: input, shape index: {}]
  %s5 = inlined_call_operand.vmem [shape: f32[32,128], index: 5, kind: input, shape index: {}]
  %s6 = inlined_call_operand.vmem [shape: f32[32,128], index: 6, kind: input, shape index: {}]
  %s7 = inlined_call_operand.vmem [shape: f32[1,128], index: 7, kind: input, shape index: {}]
  %s8 = inlined_call_operand.vmem [shape: f32[32,8], index: 8, kind: input, shape index: {}]
  %s9 = inlined_call_operand.vmem [shape: f32[1,8], index: 9, kind: input, shape index: {}]
  %s10 = inlined_call_operand.hbm [shape: f32[2,8], index: 10, kind: output, shape index: {}]
  %s11 = sld [smem:[#allocation0]]
  $region50: #{crnn_forward.1} parent=0
    _
  %s13 = ssub.s32 1, %s11
  %s14 = scalar_select 0, %s13, %s11
  $region1: #{crnn_forward.1} parent=0
    #allocation2 [shape = 'u8[1024]{0}', space=vmem, size = 0x400, scoped, tag = 'output window, operand 0, single buffered']
    #allocation3 [shape = 's32[1]{0}', space=sflag, size = 0x4, scoped, tag = 'scoped memory for crnn_forward.1']
    %15 = vsyncpa [#allocation3], 0
    // Predicated region
    $region2: #{crnn_forward.1} parent=1 // pred_check
      _
    $region3: #{crnn_forward.1} parent=1 // pred_check_branch
      %17 = sbr.rel (0) target = $region5
    $region4: #{crnn_forward.1} parent=1 // pred_region
      _
    $region5: #{crnn_forward.1} parent=1 // pred_fallthru
      _
    // Predicated region
    $region6: #{crnn_forward.1} parent=1 // pred_check
      _
    $region7: #{crnn_forward.1} parent=1 // pred_check_branch
      %19 = sbr.rel (0) target = $region9
    $region8: #{crnn_forward.1} parent=1 // pred_region
      _
    $region9: #{crnn_forward.1} parent=1 // pred_fallthru
      _
    // Predicated region
    $region10: #{crnn_forward.1} parent=1 // pred_check
      _
    $region11: #{crnn_forward.1} parent=1 // pred_check_branch
      %21 = sbr.rel (0) target = $region13
    $region12: #{crnn_forward.1} parent=1 // pred_region
      _
    $region13: #{crnn_forward.1} parent=1 // pred_fallthru
      _
    // Predicated region
    $region14: #{crnn_forward.1} parent=1 // pred_check
      _
    $region15: #{crnn_forward.1} parent=1 // pred_check_branch
      %23 = sbr.rel (0) target = $region17
    $region16: #{crnn_forward.1} parent=1 // pred_region
      _
    $region17: #{crnn_forward.1} parent=1 // pred_fallthru
      _
    // Predicated region
    $region18: #{crnn_forward.1} parent=1 // pred_check
      _
    $region19: #{crnn_forward.1} parent=1 // pred_check_branch
      %25 = sbr.rel (0) target = $region21
    $region20: #{crnn_forward.1} parent=1 // pred_region
      _
    $region21: #{crnn_forward.1} parent=1 // pred_fallthru
      _
    // Predicated region
    $region22: #{crnn_forward.1} parent=1 // pred_check
      _
    $region23: #{crnn_forward.1} parent=1 // pred_check_branch
      %27 = sbr.rel (0) target = $region25
    $region24: #{crnn_forward.1} parent=1 // pred_region
      _
    $region25: #{crnn_forward.1} parent=1 // pred_fallthru
      _
    // Predicated region
    $region26: #{crnn_forward.1} parent=1 // pred_check
      _
    $region27: #{crnn_forward.1} parent=1 // pred_check_branch
      %29 = sbr.rel (0) target = $region29
    $region28: #{crnn_forward.1} parent=1 // pred_region
      _
    $region29: #{crnn_forward.1} parent=1 // pred_fallthru
      _
    // Predicated region
    $region30: #{crnn_forward.1} parent=1 // pred_check
      _
    $region31: #{crnn_forward.1} parent=1 // pred_check_branch
      %31 = sbr.rel (0) target = $region33
    $region32: #{crnn_forward.1} parent=1 // pred_region
      _
    $region33: #{crnn_forward.1} parent=1 // pred_fallthru
      _
    // Predicated region
    $region34: #{crnn_forward.1} parent=1 // pred_check
      _
    $region35: #{crnn_forward.1} parent=1 // pred_check_branch
      %33 = sbr.rel (0) target = $region37
    $region36: #{crnn_forward.1} parent=1 // pred_region
      _
    $region37: #{crnn_forward.1} parent=1 // pred_fallthru
      _
    // Predicated region
    $region38: #{crnn_forward.1} parent=1 // pred_check
      _
    $region39: #{crnn_forward.1} parent=1 // pred_check_branch
      %35 = sbr.rel (0) target = $region41
    $region40: #{crnn_forward.1} parent=1 // pred_region
      _
    $region41: #{crnn_forward.1} parent=1 // pred_fallthru
      _
    %v36 = vld [vmem:[%s0] sm:$0x1]
    %v37 = vld [vmem:[%s0 + $0x10] sm:$0x1]
    %v38 = vld [vmem:[%s0 + $0x1] sm:$0x1]
    %v39 = vld [vmem:[%s0 + $0x11] sm:$0x1]
    %v40 = vld [vmem:[%s0 + $0x2] sm:$0x1]
    %v41 = vld [vmem:[%s0 + $0x12] sm:$0x1]
    %v42 = vld [vmem:[%s0 + $0x3] sm:$0x1]
    %v43 = vld [vmem:[%s0 + $0x13] sm:$0x1]
    %v44 = vld [vmem:[%s0 + $0x4] sm:$0x1]
    %v45 = vld [vmem:[%s0 + $0x14] sm:$0x1]
    %v46 = vld [vmem:[%s0 + $0x5] sm:$0x1]
    %v47 = vld [vmem:[%s0 + $0x15] sm:$0x1]
    %v48 = vld [vmem:[%s0 + $0x6] sm:$0x1]
    %v49 = vld [vmem:[%s0 + $0x16] sm:$0x1]
    %v50 = vld [vmem:[%s0 + $0x7] sm:$0x1]
    %v51 = vld [vmem:[%s0 + $0x17] sm:$0x1]
    %v52 = vld [vmem:[%s0 + $0x8] sm:$0x1]
    %v53 = vld [vmem:[%s0 + $0x18] sm:$0x1]
    %v54 = vld [vmem:[%s0 + $0x9] sm:$0x1]
    %v55 = vld [vmem:[%s0 + $0x19] sm:$0x1]
    %v56 = vld [vmem:[%s0 + $0xa] sm:$0x1]
    %v57 = vld [vmem:[%s0 + $0x1a] sm:$0x1]
    %v58 = vld [vmem:[%s0 + $0xb] sm:$0x1]
    %v59 = vld [vmem:[%s0 + $0x1b] sm:$0x1]
    %v60 = vld [vmem:[%s0 + $0xc] sm:$0x1]
    %v61 = vld [vmem:[%s0 + $0x1c] sm:$0x1]
    %v62 = vld [vmem:[%s0 + $0xd] sm:$0x1]
    %v63 = vld [vmem:[%s0 + $0x1d] sm:$0x1]
    %v64 = vld [vmem:[%s0 + $0xe] sm:$0x1]
    %v65 = vld [vmem:[%s0 + $0x1e] sm:$0x1]
    %v66 = vld [vmem:[%s1] sm:$0xff]
    %v67 = vld [vmem:[%s1 + $0x8] sm:$0xf]
    %v68 = vld [vmem:[%s2] sm:$0x1]
    %v71 = vrot.slane %v37, 7
    %vm72 = vcmask 1041409
    %v73 = vsel %vm72, %v71, %v36
    %vm74 = vcmask 31744
    %v75 = vsel %vm74, %v73, 0
    %vm77 = vcmask 1043456
    %v79 = vsel %vm77, %v66, 0
    %81 = vmatpush.msra.mxu0 0.0
    %82 = vmatpush.msra.mxu0 0.0
    %83 = vmatpush.msra.mxu0 0.0
    %84 = vmatpush.msra.mxu0 0.0
    %85 = vmatpush.msra.mxu0 0.0
    %86 = vmatpush.msra.mxu0 0.0
    %87 = vmatpush.msra.mxu0 0.0
    %88 = vmatpush.msra.mxu0 0.0
    %89 = vmatpush.msra.mxu0 0.0
    %90 = vmatpush.msra.mxu0 0.0
    %91 = vmatpush.msra.mxu0 0.0
    %92 = vmatpush.msra.mxu0 0.0
    %93 = vmatpush.msra.mxu0 0.0
    %94 = vmatpush.msra.mxu0 0.0
    %95 = vmatpush.msra.mxu0 0.0
    %96 = vmatpush.msra.mxu0 %v79
    %97 = vmatmul.f32.gmra.mxu0 %v75
    %v98 = vpop.f32.mrf.mxu0
    %v99 = vadd.f32 0.0, %v98
    %100 = vdwg.mxu0
    %v102 = vperm.slane %v68, 0
    %v104 = vadd.f32 %v102, %v99
    %v107 = vrot.slane %v39, 7
    %v108 = vsel %vm72, %v107, %v38
    %v109 = vrot.slane %v66, 4
    %v110 = vsel %vm74, %v108, 0
    %v112 = vsel %vm77, %v109, 0
    %114 = vmatpush.msra.mxu0 0.0
    %115 = vmatpush.msra.mxu0 0.0
    %116 = vmatpush.msra.mxu0 0.0
    %117 = vmatpush.msra.mxu0 0.0
    %118 = vmatpush.msra.mxu0 0.0
    %119 = vmatpush.msra.mxu0 0.0
    %120 = vmatpush.msra.mxu0 0.0
    %121 = vmatpush.msra.mxu0 0.0
    %122 = vmatpush.msra.mxu0 0.0
    %123 = vmatpush.msra.mxu0 0.0
    %124 = vmatpush.msra.mxu0 0.0
    %125 = vmatpush.msra.mxu0 0.0
    %126 = vmatpush.msra.mxu0 0.0
    %127 = vmatpush.msra.mxu0 0.0
    %128 = vmatpush.msra.mxu0 0.0
    %129 = vmatpush.msra.mxu0 %v112
    %130 = vmatmul.f32.gmra.mxu0 %v110
    %v131 = vpop.f32.mrf.mxu0
    %v132 = vadd.f32 0.0, %v131
    %133 = vdwg.mxu0
    %v134 = vadd.f32 %v104, %v132
    %v137 = vrot.slane %v41, 7
    %v138 = vsel %vm72, %v137, %v40
    %v139 = vsel %vm74, %v138, 0
    %v142 = vsel %vm77, %v67, 0
    %144 = vmatpush.msra.mxu0 0.0
    %145 = vmatpush.msra.mxu0 0.0
    %146 = vmatpush.msra.mxu0 0.0
    %147 = vmatpush.msra.mxu0 0.0
    %148 = vmatpush.msra.mxu0 0.0
    %149 = vmatpush.msra.mxu0 0.0
    %150 = vmatpush.msra.mxu0 0.0
    %151 = vmatpush.msra.mxu0 0.0
    %152 = vmatpush.msra.mxu0 0.0
    %153 = vmatpush.msra.mxu0 0.0
    %154 = vmatpush.msra.mxu0 0.0
    %155 = vmatpush.msra.mxu0 0.0
    %156 = vmatpush.msra.mxu0 0.0
    %157 = vmatpush.msra.mxu0 0.0
    %158 = vmatpush.msra.mxu0 0.0
    %159 = vmatpush.msra.mxu0 %v142
    %160 = vmatmul.f32.gmra.mxu0 %v139
    %v161 = vpop.f32.mrf.mxu0
    %v162 = vadd.f32 0.0, %v161
    %163 = vdwg.mxu0
    %v164 = vadd.f32 %v134, %v162
    %vm165 = vcmp.ge.f32.partialorder %v164, 0.0
    %v166 = vmul.f32 %v164, 0.01
    %v167 = vsel %vm165, %v164, %v166
    %168 = vmatpush.msra.mxu0 0.0
    %169 = vmatpush.msra.mxu0 0.0
    %170 = vmatpush.msra.mxu0 0.0
    %171 = vmatpush.msra.mxu0 0.0
    %172 = vmatpush.msra.mxu0 0.0
    %173 = vmatpush.msra.mxu0 0.0
    %174 = vmatpush.msra.mxu0 0.0
    %175 = vmatpush.msra.mxu0 0.0
    %176 = vmatpush.msra.mxu0 0.0
    %177 = vmatpush.msra.mxu0 0.0
    %178 = vmatpush.msra.mxu0 0.0
    %179 = vmatpush.msra.mxu0 0.0
    %180 = vmatpush.msra.mxu0 0.0
    %181 = vmatpush.msra.mxu0 0.0
    %182 = vmatpush.msra.mxu0 0.0
    %183 = vmatpush.msra.mxu0 %v79
    %184 = vmatmul.f32.gmra.mxu0 %v139
    %v185 = vpop.f32.mrf.mxu0
    %v186 = vadd.f32 0.0, %v185
    %187 = vdwg.mxu0
    %v188 = vadd.f32 %v102, %v186
    %v191 = vrot.slane %v43, 7
    %v192 = vsel %vm72, %v191, %v42
    %v193 = vsel %vm74, %v192, 0
    %195 = vmatpush.msra.mxu0 0.0
    %196 = vmatpush.msra.mxu0 0.0
    %197 = vmatpush.msra.mxu0 0.0
    %198 = vmatpush.msra.mxu0 0.0
    %199 = vmatpush.msra.mxu0 0.0
    %200 = vmatpush.msra.mxu0 0.0
    %201 = vmatpush.msra.mxu0 0.0
    %202 = vmatpush.msra.mxu0 0.0
    %203 = vmatpush.msra.mxu0 0.0
    %204 = vmatpush.msra.mxu0 0.0
    %205 = vmatpush.msra.mxu0 0.0
    %206 = vmatpush.msra.mxu0 0.0
    %207 = vmatpush.msra.mxu0 0.0
    %208 = vmatpush.msra.mxu0 0.0
    %209 = vmatpush.msra.mxu0 0.0
    %210 = vmatpush.msra.mxu0 %v112
    %211 = vmatmul.f32.gmra.mxu0 %v193
    %v212 = vpop.f32.mrf.mxu0
    %v213 = vadd.f32 0.0, %v212
    %214 = vdwg.mxu0
    %v215 = vadd.f32 %v188, %v213
    %v218 = vrot.slane %v45, 7
    %v219 = vsel %vm72, %v218, %v44
    %v220 = vsel %vm74, %v219, 0
    %222 = vmatpush.msra.mxu0 0.0
    %223 = vmatpush.msra.mxu0 0.0
    %224 = vmatpush.msra.mxu0 0.0
    %225 = vmatpush.msra.mxu0 0.0
    %226 = vmatpush.msra.mxu0 0.0
    %227 = vmatpush.msra.mxu0 0.0
    %228 = vmatpush.msra.mxu0 0.0
    %229 = vmatpush.msra.mxu0 0.0
    %230 = vmatpush.msra.mxu0 0.0
    %231 = vmatpush.msra.mxu0 0.0
    %232 = vmatpush.msra.mxu0 0.0
    %233 = vmatpush.msra.mxu0 0.0
    %234 = vmatpush.msra.mxu0 0.0
    %235 = vmatpush.msra.mxu0 0.0
    %236 = vmatpush.msra.mxu0 0.0
    %237 = vmatpush.msra.mxu0 %v142
    %238 = vmatmul.f32.gmra.mxu0 %v220
    %v239 = vpop.f32.mrf.mxu0
    %v240 = vadd.f32 0.0, %v239
    %241 = vdwg.mxu0
    %v242 = vadd.f32 %v215, %v240
    %vm243 = vcmp.ge.f32.partialorder %v242, 0.0
    %v244 = vmul.f32 %v242, 0.01
    %v245 = vsel %vm243, %v242, %v244
    %246 = vmatpush.msra.mxu0 0.0
    %247 = vmatpush.msra.mxu0 0.0
    %248 = vmatpush.msra.mxu0 0.0
    %249 = vmatpush.msra.mxu0 0.0
    %250 = vmatpush.msra.mxu0 0.0
    %251 = vmatpush.msra.mxu0 0.0
    %252 = vmatpush.msra.mxu0 0.0
    %253 = vmatpush.msra.mxu0 0.0
    %254 = vmatpush.msra.mxu0 0.0
    %255 = vmatpush.msra.mxu0 0.0
    %256 = vmatpush.msra.mxu0 0.0
    %257 = vmatpush.msra.mxu0 0.0
    %258 = vmatpush.msra.mxu0 0.0
    %259 = vmatpush.msra.mxu0 0.0
    %260 = vmatpush.msra.mxu0 0.0
    %261 = vmatpush.msra.mxu0 %v79
    %262 = vmatmul.f32.gmra.mxu0 %v220
    %v263 = vpop.f32.mrf.mxu0
    %v264 = vadd.f32 0.0, %v263
    %265 = vdwg.mxu0
    %v266 = vadd.f32 %v102, %v264
    %v269 = vrot.slane %v47, 7
    %v270 = vsel %vm72, %v269, %v46
    %v271 = vsel %vm74, %v270, 0
    %273 = vmatpush.msra.mxu0 0.0
    %274 = vmatpush.msra.mxu0 0.0
    %275 = vmatpush.msra.mxu0 0.0
    %276 = vmatpush.msra.mxu0 0.0
    %277 = vmatpush.msra.mxu0 0.0
    %278 = vmatpush.msra.mxu0 0.0
    %279 = vmatpush.msra.mxu0 0.0
    %280 = vmatpush.msra.mxu0 0.0
    %281 = vmatpush.msra.mxu0 0.0
    %282 = vmatpush.msra.mxu0 0.0
    %283 = vmatpush.msra.mxu0 0.0
    %284 = vmatpush.msra.mxu0 0.0
    %285 = vmatpush.msra.mxu0 0.0
    %286 = vmatpush.msra.mxu0 0.0
    %287 = vmatpush.msra.mxu0 0.0
    %288 = vmatpush.msra.mxu0 %v112
    %289 = vmatmul.f32.gmra.mxu0 %v271
    %v290 = vpop.f32.mrf.mxu0
    %v291 = vadd.f32 0.0, %v290
    %292 = vdwg.mxu0
    %v293 = vadd.f32 %v266, %v291
    %v296 = vrot.slane %v49, 7
    %v297 = vsel %vm72, %v296, %v48
    %v298 = vsel %vm74, %v297, 0
    %300 = vmatpush.msra.mxu0 0.0
    %301 = vmatpush.msra.mxu0 0.0
    %302 = vmatpush.msra.mxu0 0.0
    %303 = vmatpush.msra.mxu0 0.0
    %304 = vmatpush.msra.mxu0 0.0
    %305 = vmatpush.msra.mxu0 0.0
    %306 = vmatpush.msra.mxu0 0.0
    %307 = vmatpush.msra.mxu0 0.0
    %308 = vmatpush.msra.mxu0 0.0
    %309 = vmatpush.msra.mxu0 0.0
    %310 = vmatpush.msra.mxu0 0.0
    %311 = vmatpush.msra.mxu0 0.0
    %312 = vmatpush.msra.mxu0 0.0
    %313 = vmatpush.msra.mxu0 0.0
    %314 = vmatpush.msra.mxu0 0.0
    %315 = vmatpush.msra.mxu0 %v142
    %316 = vmatmul.f32.gmra.mxu0 %v298
    %v317 = vpop.f32.mrf.mxu0
    %v318 = vadd.f32 0.0, %v317
    %319 = vdwg.mxu0
    %v320 = vadd.f32 %v293, %v318
    %vm321 = vcmp.ge.f32.partialorder %v320, 0.0
    %v322 = vmul.f32 %v320, 0.01
    %v323 = vsel %vm321, %v320, %v322
    %324 = vmatpush.msra.mxu0 0.0
    %325 = vmatpush.msra.mxu0 0.0
    %326 = vmatpush.msra.mxu0 0.0
    %327 = vmatpush.msra.mxu0 0.0
    %328 = vmatpush.msra.mxu0 0.0
    %329 = vmatpush.msra.mxu0 0.0
    %330 = vmatpush.msra.mxu0 0.0
    %331 = vmatpush.msra.mxu0 0.0
    %332 = vmatpush.msra.mxu0 0.0
    %333 = vmatpush.msra.mxu0 0.0
    %334 = vmatpush.msra.mxu0 0.0
    %335 = vmatpush.msra.mxu0 0.0
    %336 = vmatpush.msra.mxu0 0.0
    %337 = vmatpush.msra.mxu0 0.0
    %338 = vmatpush.msra.mxu0 0.0
    %339 = vmatpush.msra.mxu0 %v79
    %340 = vmatmul.f32.gmra.mxu0 %v298
    %v341 = vpop.f32.mrf.mxu0
    %v342 = vadd.f32 0.0, %v341
    %343 = vdwg.mxu0
    %v344 = vadd.f32 %v102, %v342
    %v347 = vrot.slane %v51, 7
    %v348 = vsel %vm72, %v347, %v50
    %v349 = vsel %vm74, %v348, 0
    %351 = vmatpush.msra.mxu0 0.0
    %352 = vmatpush.msra.mxu0 0.0
    %353 = vmatpush.msra.mxu0 0.0
    %354 = vmatpush.msra.mxu0 0.0
    %355 = vmatpush.msra.mxu0 0.0
    %356 = vmatpush.msra.mxu0 0.0
    %357 = vmatpush.msra.mxu0 0.0
    %358 = vmatpush.msra.mxu0 0.0
    %359 = vmatpush.msra.mxu0 0.0
    %360 = vmatpush.msra.mxu0 0.0
    %361 = vmatpush.msra.mxu0 0.0
    %362 = vmatpush.msra.mxu0 0.0
    %363 = vmatpush.msra.mxu0 0.0
    %364 = vmatpush.msra.mxu0 0.0
    %365 = vmatpush.msra.mxu0 0.0
    %366 = vmatpush.msra.mxu0 %v112
    %367 = vmatmul.f32.gmra.mxu0 %v349
    %v368 = vpop.f32.mrf.mxu0
    %v369 = vadd.f32 0.0, %v368
    %370 = vdwg.mxu0
    %v371 = vadd.f32 %v344, %v369
    %v374 = vrot.slane %v53, 7
    %v375 = vsel %vm72, %v374, %v52
    %v376 = vsel %vm74, %v375, 0
    %378 = vmatpush.msra.mxu0 0.0
    %379 = vmatpush.msra.mxu0 0.0
    %380 = vmatpush.msra.mxu0 0.0
    %381 = vmatpush.msra.mxu0 0.0
    %382 = vmatpush.msra.mxu0 0.0
    %383 = vmatpush.msra.mxu0 0.0
    %384 = vmatpush.msra.mxu0 0.0
    %385 = vmatpush.msra.mxu0 0.0
    %386 = vmatpush.msra.mxu0 0.0
    %387 = vmatpush.msra.mxu0 0.0
    %388 = vmatpush.msra.mxu0 0.0
    %389 = vmatpush.msra.mxu0 0.0
    %390 = vmatpush.msra.mxu0 0.0
    %391 = vmatpush.msra.mxu0 0.0
    %392 = vmatpush.msra.mxu0 0.0
    %393 = vmatpush.msra.mxu0 %v142
    %394 = vmatmul.f32.gmra.mxu0 %v376
    %v395 = vpop.f32.mrf.mxu0
    %v396 = vadd.f32 0.0, %v395
    %397 = vdwg.mxu0
    %v398 = vadd.f32 %v371, %v396
    %vm399 = vcmp.ge.f32.partialorder %v398, 0.0
    %v400 = vmul.f32 %v398, 0.01
    %v401 = vsel %vm399, %v398, %v400
    %402 = vmatpush.msra.mxu0 0.0
    %403 = vmatpush.msra.mxu0 0.0
    %404 = vmatpush.msra.mxu0 0.0
    %405 = vmatpush.msra.mxu0 0.0
    %406 = vmatpush.msra.mxu0 0.0
    %407 = vmatpush.msra.mxu0 0.0
    %408 = vmatpush.msra.mxu0 0.0
    %409 = vmatpush.msra.mxu0 0.0
    %410 = vmatpush.msra.mxu0 0.0
    %411 = vmatpush.msra.mxu0 0.0
    %412 = vmatpush.msra.mxu0 0.0
    %413 = vmatpush.msra.mxu0 0.0
    %414 = vmatpush.msra.mxu0 0.0
    %415 = vmatpush.msra.mxu0 0.0
    %416 = vmatpush.msra.mxu0 0.0
    %417 = vmatpush.msra.mxu0 %v79
    %418 = vmatmul.f32.gmra.mxu0 %v376
    %v419 = vpop.f32.mrf.mxu0
    %v420 = vadd.f32 0.0, %v419
    %421 = vdwg.mxu0
    %v422 = vadd.f32 %v102, %v420
    %v425 = vrot.slane %v55, 7
    %v426 = vsel %vm72, %v425, %v54
    %v427 = vsel %vm74, %v426, 0
    %429 = vmatpush.msra.mxu0 0.0
    %430 = vmatpush.msra.mxu0 0.0
    %431 = vmatpush.msra.mxu0 0.0
    %432 = vmatpush.msra.mxu0 0.0
    %433 = vmatpush.msra.mxu0 0.0
    %434 = vmatpush.msra.mxu0 0.0
    %435 = vmatpush.msra.mxu0 0.0
    %436 = vmatpush.msra.mxu0 0.0
    %437 = vmatpush.msra.mxu0 0.0
    %438 = vmatpush.msra.mxu0 0.0
    %439 = vmatpush.msra.mxu0 0.0
    %440 = vmatpush.msra.mxu0 0.0
    %441 = vmatpush.msra.mxu0 0.0
    %442 = vmatpush.msra.mxu0 0.0
    %443 = vmatpush.msra.mxu0 0.0
    %444 = vmatpush.msra.mxu0 %v112
    %445 = vmatmul.f32.gmra.mxu0 %v427
    %v446 = vpop.f32.mrf.mxu0
    %v447 = vadd.f32 0.0, %v446
    %448 = vdwg.mxu0
    %v449 = vadd.f32 %v422, %v447
    %v452 = vrot.slane %v57, 7
    %v453 = vsel %vm72, %v452, %v56
    %v454 = vsel %vm74, %v453, 0
    %456 = vmatpush.msra.mxu0 0.0
    %457 = vmatpush.msra.mxu0 0.0
    %458 = vmatpush.msra.mxu0 0.0
    %459 = vmatpush.msra.mxu0 0.0
    %460 = vmatpush.msra.mxu0 0.0
    %461 = vmatpush.msra.mxu0 0.0
    %462 = vmatpush.msra.mxu0 0.0
    %463 = vmatpush.msra.mxu0 0.0
    %464 = vmatpush.msra.mxu0 0.0
    %465 = vmatpush.msra.mxu0 0.0
    %466 = vmatpush.msra.mxu0 0.0
    %467 = vmatpush.msra.mxu0 0.0
    %468 = vmatpush.msra.mxu0 0.0
    %469 = vmatpush.msra.mxu0 0.0
    %470 = vmatpush.msra.mxu0 0.0
    %471 = vmatpush.msra.mxu0 %v142
    %472 = vmatmul.f32.gmra.mxu0 %v454
    %v473 = vpop.f32.mrf.mxu0
    %v474 = vadd.f32 0.0, %v473
    %475 = vdwg.mxu0
    %v476 = vadd.f32 %v449, %v474
    %vm477 = vcmp.ge.f32.partialorder %v476, 0.0
    %v478 = vmul.f32 %v476, 0.01
    %v479 = vsel %vm477, %v476, %v478
    %480 = vmatpush.msra.mxu0 0.0
    %481 = vmatpush.msra.mxu0 0.0
    %482 = vmatpush.msra.mxu0 0.0
    %483 = vmatpush.msra.mxu0 0.0
    %484 = vmatpush.msra.mxu0 0.0
    %485 = vmatpush.msra.mxu0 0.0
    %486 = vmatpush.msra.mxu0 0.0
    %487 = vmatpush.msra.mxu0 0.0
    %488 = vmatpush.msra.mxu0 0.0
    %489 = vmatpush.msra.mxu0 0.0
    %490 = vmatpush.msra.mxu0 0.0
    %491 = vmatpush.msra.mxu0 0.0
    %492 = vmatpush.msra.mxu0 0.0
    %493 = vmatpush.msra.mxu0 0.0
    %494 = vmatpush.msra.mxu0 0.0
    %495 = vmatpush.msra.mxu0 %v79
    %496 = vmatmul.f32.gmra.mxu0 %v454
    %v497 = vpop.f32.mrf.mxu0
    %v498 = vadd.f32 0.0, %v497
    %499 = vdwg.mxu0
    %v500 = vadd.f32 %v102, %v498
    %v503 = vrot.slane %v59, 7
    %v504 = vsel %vm72, %v503, %v58
    %v505 = vsel %vm74, %v504, 0
    %507 = vmatpush.msra.mxu0 0.0
    %508 = vmatpush.msra.mxu0 0.0
    %509 = vmatpush.msra.mxu0 0.0
    %510 = vmatpush.msra.mxu0 0.0
    %511 = vmatpush.msra.mxu0 0.0
    %512 = vmatpush.msra.mxu0 0.0
    %513 = vmatpush.msra.mxu0 0.0
    %514 = vmatpush.msra.mxu0 0.0
    %515 = vmatpush.msra.mxu0 0.0
    %516 = vmatpush.msra.mxu0 0.0
    %517 = vmatpush.msra.mxu0 0.0
    %518 = vmatpush.msra.mxu0 0.0
    %519 = vmatpush.msra.mxu0 0.0
    %520 = vmatpush.msra.mxu0 0.0
    %521 = vmatpush.msra.mxu0 0.0
    %522 = vmatpush.msra.mxu0 %v112
    %523 = vmatmul.f32.gmra.mxu0 %v505
    %v524 = vpop.f32.mrf.mxu0
    %v525 = vadd.f32 0.0, %v524
    %526 = vdwg.mxu0
    %v527 = vadd.f32 %v500, %v525
    %v530 = vrot.slane %v61, 7
    %v531 = vsel %vm72, %v530, %v60
    %v532 = vsel %vm74, %v531, 0
    %534 = vmatpush.msra.mxu0 0.0
    %535 = vmatpush.msra.mxu0 0.0
    %536 = vmatpush.msra.mxu0 0.0
    %537 = vmatpush.msra.mxu0 0.0
    %538 = vmatpush.msra.mxu0 0.0
    %539 = vmatpush.msra.mxu0 0.0
    %540 = vmatpush.msra.mxu0 0.0
    %541 = vmatpush.msra.mxu0 0.0
    %542 = vmatpush.msra.mxu0 0.0
    %543 = vmatpush.msra.mxu0 0.0
    %544 = vmatpush.msra.mxu0 0.0
    %545 = vmatpush.msra.mxu0 0.0
    %546 = vmatpush.msra.mxu0 0.0
    %547 = vmatpush.msra.mxu0 0.0
    %548 = vmatpush.msra.mxu0 0.0
    %549 = vmatpush.msra.mxu0 %v142
    %550 = vmatmul.f32.gmra.mxu0 %v532
    %v551 = vpop.f32.mrf.mxu0
    %v552 = vadd.f32 0.0, %v551
    %553 = vdwg.mxu0
    %v554 = vadd.f32 %v527, %v552
    %vm555 = vcmp.ge.f32.partialorder %v554, 0.0
    %v556 = vmul.f32 %v554, 0.01
    %v557 = vsel %vm555, %v554, %v556
    %558 = vmatpush.msra.mxu0 0.0
    %559 = vmatpush.msra.mxu0 0.0
    %560 = vmatpush.msra.mxu0 0.0
    %561 = vmatpush.msra.mxu0 0.0
    %562 = vmatpush.msra.mxu0 0.0
    %563 = vmatpush.msra.mxu0 0.0
    %564 = vmatpush.msra.mxu0 0.0
    %565 = vmatpush.msra.mxu0 0.0
    %566 = vmatpush.msra.mxu0 0.0
    %567 = vmatpush.msra.mxu0 0.0
    %568 = vmatpush.msra.mxu0 0.0
    %569 = vmatpush.msra.mxu0 0.0
    %570 = vmatpush.msra.mxu0 0.0
    %571 = vmatpush.msra.mxu0 0.0
    %572 = vmatpush.msra.mxu0 0.0
    %573 = vmatpush.msra.mxu0 %v79
    %574 = vmatmul.f32.gmra.mxu0 %v532
    %v575 = vpop.f32.mrf.mxu0
    %v576 = vadd.f32 0.0, %v575
    %577 = vdwg.mxu0
    %v578 = vadd.f32 %v102, %v576
    %v581 = vrot.slane %v63, 7
    %v582 = vsel %vm72, %v581, %v62
    %v583 = vsel %vm74, %v582, 0
    %585 = vmatpush.msra.mxu0 0.0
    %586 = vmatpush.msra.mxu0 0.0
    %587 = vmatpush.msra.mxu0 0.0
    %588 = vmatpush.msra.mxu0 0.0
    %589 = vmatpush.msra.mxu0 0.0
    %590 = vmatpush.msra.mxu0 0.0
    %591 = vmatpush.msra.mxu0 0.0
    %592 = vmatpush.msra.mxu0 0.0
    %593 = vmatpush.msra.mxu0 0.0
    %594 = vmatpush.msra.mxu0 0.0
    %595 = vmatpush.msra.mxu0 0.0
    %596 = vmatpush.msra.mxu0 0.0
    %597 = vmatpush.msra.mxu0 0.0
    %598 = vmatpush.msra.mxu0 0.0
    %599 = vmatpush.msra.mxu0 0.0
    %600 = vmatpush.msra.mxu0 %v112
    %601 = vmatmul.f32.gmra.mxu0 %v583
    %v602 = vpop.f32.mrf.mxu0
    %v603 = vadd.f32 0.0, %v602
    %604 = vdwg.mxu0
    %v605 = vadd.f32 %v578, %v603
    %v608 = vrot.slane %v65, 7
    %v609 = vsel %vm72, %v608, %v64
    %v610 = vsel %vm74, %v609, 0
    %612 = vmatpush.msra.mxu0 0.0
    %613 = vmatpush.msra.mxu0 0.0
    %614 = vmatpush.msra.mxu0 0.0
    %615 = vmatpush.msra.mxu0 0.0
    %616 = vmatpush.msra.mxu0 0.0
    %617 = vmatpush.msra.mxu0 0.0
    %618 = vmatpush.msra.mxu0 0.0
    %619 = vmatpush.msra.mxu0 0.0
    %620 = vmatpush.msra.mxu0 0.0
    %621 = vmatpush.msra.mxu0 0.0
    %622 = vmatpush.msra.mxu0 0.0
    %623 = vmatpush.msra.mxu0 0.0
    %624 = vmatpush.msra.mxu0 0.0
    %625 = vmatpush.msra.mxu0 0.0
    %626 = vmatpush.msra.mxu0 0.0
    %627 = vmatpush.msra.mxu0 %v142
    %628 = vmatmul.f32.gmra.mxu0 %v610
    %v629 = vpop.f32.mrf.mxu0
    %v630 = vadd.f32 0.0, %v629
    %631 = vdwg.mxu0
    %v632 = vadd.f32 %v605, %v630
    %vm633 = vcmp.ge.f32.partialorder %v632, 0.0
    %v634 = vmul.f32 %v632, 0.01
    %v635 = vsel %vm633, %v632, %v634
    %v636 = vld [vmem:[%s3] sm:$0xff]
    %v637 = vld [vmem:[%s3 + $0x8] sm:$0xff]
    %v638 = vld [vmem:[%s3 + $0x10] sm:$0xff]
    %v639 = vld [vmem:[%s3 + $0x18] sm:$0xff]
    %v640 = vld [vmem:[%s3 + $0x20] sm:$0xff]
    %v641 = vld [vmem:[%s3 + $0x28] sm:$0xff]
    %v642 = vld [vmem:[%s3 + $0x30] sm:$0xff]
    %v643 = vld [vmem:[%s3 + $0x38] sm:$0xff]
    %v644 = vld [vmem:[%s3 + $0x40] sm:$0xff]
    %v645 = vld [vmem:[%s3 + $0x48] sm:$0xff]
    %v646 = vld [vmem:[%s3 + $0x50] sm:$0xff]
    %v647 = vld [vmem:[%s3 + $0x58] sm:$0xff]
    %v648 = vld [vmem:[%s4] sm:$0x1]
    %vm649 = vcmask 261120
    %v651 = vsel %vm649, %v167, 0
    %653 = vmatpush.msra.mxu0 0.0
    %654 = vmatpush.msra.mxu0 0.0
    %655 = vmatpush.msra.mxu0 0.0
    %656 = vmatpush.msra.mxu0 0.0
    %657 = vmatpush.msra.mxu0 0.0
    %658 = vmatpush.msra.mxu0 0.0
    %659 = vmatpush.msra.mxu0 0.0
    %660 = vmatpush.msra.mxu0 0.0
    %661 = vmatpush.msra.mxu0 0.0
    %662 = vmatpush.msra.mxu0 0.0
    %663 = vmatpush.msra.mxu0 0.0
    %664 = vmatpush.msra.mxu0 0.0
    %665 = vmatpush.msra.mxu0 %v639
    %666 = vmatpush.msra.mxu0 %v638
    %667 = vmatpush.msra.mxu0 %v637
    %668 = vmatpush.msra.mxu0 %v636
    %669 = vmatmul.f32.gmra.mxu0 %v651
    %v670 = vpop.f32.mrf.mxu0
    %v671 = vadd.f32 0.0, %v670
    %672 = vdwg.mxu0
    %v674 = vperm.slane %v648, 0
    %v676 = vadd.f32 %v674, %v671
    %v678 = vsel %vm649, %v245, 0
    %680 = vmatpush.msra.mxu0 0.0
    %681 = vmatpush.msra.mxu0 0.0
    %682 = vmatpush.msra.mxu0 0.0
    %683 = vmatpush.msra.mxu0 0.0
    %684 = vmatpush.msra.mxu0 0.0
    %685 = vmatpush.msra.mxu0 0.0
    %686 = vmatpush.msra.mxu0 0.0
    %687 = vmatpush.msra.mxu0 0.0
    %688 = vmatpush.msra.mxu0 0.0
    %689 = vmatpush.msra.mxu0 0.0
    %690 = vmatpush.msra.mxu0 0.0
    %691 = vmatpush.msra.mxu0 0.0
    %692 = vmatpush.msra.mxu0 %v643
    %693 = vmatpush.msra.mxu0 %v642
    %694 = vmatpush.msra.mxu0 %v641
    %695 = vmatpush.msra.mxu0 %v640
    %696 = vmatmul.f32.gmra.mxu0 %v678
    %v697 = vpop.f32.mrf.mxu0
    %v698 = vadd.f32 0.0, %v697
    %699 = vdwg.mxu0
    %v700 = vadd.f32 %v676, %v698
    %v702 = vsel %vm649, %v323, 0
    %704 = vmatpush.msra.mxu0 0.0
    %705 = vmatpush.msra.mxu0 0.0
    %706 = vmatpush.msra.mxu0 0.0
    %707 = vmatpush.msra.mxu0 0.0
    %708 = vmatpush.msra.mxu0 0.0
    %709 = vmatpush.msra.mxu0 0.0
    %710 = vmatpush.msra.mxu0 0.0
    %711 = vmatpush.msra.mxu0 0.0
    %712 = vmatpush.msra.mxu0 0.0
    %713 = vmatpush.msra.mxu0 0.0
    %714 = vmatpush.msra.mxu0 0.0
    %715 = vmatpush.msra.mxu0 0.0
    %716 = vmatpush.msra.mxu0 %v647
    %717 = vmatpush.msra.mxu0 %v646
    %718 = vmatpush.msra.mxu0 %v645
    %719 = vmatpush.msra.mxu0 %v644
    %720 = vmatmul.f32.gmra.mxu0 %v702
    %v721 = vpop.f32.mrf.mxu0
    %v722 = vadd.f32 0.0, %v721
    %723 = vdwg.mxu0
    %v724 = vadd.f32 %v700, %v722
    %vm725 = vcmp.ge.f32.partialorder %v724, 0.0
    %v726 = vmul.f32 %v724, 0.01
    %v727 = vsel %vm725, %v724, %v726
    %728 = vmatpush.msra.mxu0 0.0
    %729 = vmatpush.msra.mxu0 0.0
    %730 = vmatpush.msra.mxu0 0.0
    %731 = vmatpush.msra.mxu0 0.0
    %732 = vmatpush.msra.mxu0 0.0
    %733 = vmatpush.msra.mxu0 0.0
    %734 = vmatpush.msra.mxu0 0.0
    %735 = vmatpush.msra.mxu0 0.0
    %736 = vmatpush.msra.mxu0 0.0
    %737 = vmatpush.msra.mxu0 0.0
    %738 = vmatpush.msra.mxu0 0.0
    %739 = vmatpush.msra.mxu0 0.0
    %740 = vmatpush.msra.mxu0 %v639
    %741 = vmatpush.msra.mxu0 %v638
    %742 = vmatpush.msra.mxu0 %v637
    %743 = vmatpush.msra.mxu0 %v636
    %744 = vmatmul.f32.gmra.mxu0 %v702
    %v745 = vpop.f32.mrf.mxu0
    %v746 = vadd.f32 0.0, %v745
    %747 = vdwg.mxu0
    %v748 = vadd.f32 %v674, %v746
    %v750 = vsel %vm649, %v401, 0
    %752 = vmatpush.msra.mxu0 0.0
    %753 = vmatpush.msra.mxu0 0.0
    %754 = vmatpush.msra.mxu0 0.0
    %755 = vmatpush.msra.mxu0 0.0
    %756 = vmatpush.msra.mxu0 0.0
    %757 = vmatpush.msra.mxu0 0.0
    %758 = vmatpush.msra.mxu0 0.0
    %759 = vmatpush.msra.mxu0 0.0
    %760 = vmatpush.msra.mxu0 0.0
    %761 = vmatpush.msra.mxu0 0.0
    %762 = vmatpush.msra.mxu0 0.0
    %763 = vmatpush.msra.mxu0 0.0
    %764 = vmatpush.msra.mxu0 %v643
    %765 = vmatpush.msra.mxu0 %v642
    %766 = vmatpush.msra.mxu0 %v641
    %767 = vmatpush.msra.mxu0 %v640
    %768 = vmatmul.f32.gmra.mxu0 %v750
    %v769 = vpop.f32.mrf.mxu0
    %v770 = vadd.f32 0.0, %v769
    %771 = vdwg.mxu0
    %v772 = vadd.f32 %v748, %v770
    %v774 = vsel %vm649, %v479, 0
    %776 = vmatpush.msra.mxu0 0.0
    %777 = vmatpush.msra.mxu0 0.0
    %778 = vmatpush.msra.mxu0 0.0
    %779 = vmatpush.msra.mxu0 0.0
    %780 = vmatpush.msra.mxu0 0.0
    %781 = vmatpush.msra.mxu0 0.0
    %782 = vmatpush.msra.mxu0 0.0
    %783 = vmatpush.msra.mxu0 0.0
    %784 = vmatpush.msra.mxu0 0.0
    %785 = vmatpush.msra.mxu0 0.0
    %786 = vmatpush.msra.mxu0 0.0
    %787 = vmatpush.msra.mxu0 0.0
    %788 = vmatpush.msra.mxu0 %v647
    %789 = vmatpush.msra.mxu0 %v646
    %790 = vmatpush.msra.mxu0 %v645
    %791 = vmatpush.msra.mxu0 %v644
    %792 = vmatmul.f32.gmra.mxu0 %v774
    %v793 = vpop.f32.mrf.mxu0
    %v794 = vadd.f32 0.0, %v793
    %795 = vdwg.mxu0
    %v796 = vadd.f32 %v772, %v794
    %vm797 = vcmp.ge.f32.partialorder %v796, 0.0
    %v798 = vmul.f32 %v796, 0.01
    %v799 = vsel %vm797, %v796, %v798
    %800 = vmatpush.msra.mxu0 0.0
    %801 = vmatpush.msra.mxu0 0.0
    %802 = vmatpush.msra.mxu0 0.0
    %803 = vmatpush.msra.mxu0 0.0
    %804 = vmatpush.msra.mxu0 0.0
    %805 = vmatpush.msra.mxu0 0.0
    %806 = vmatpush.msra.mxu0 0.0
    %807 = vmatpush.msra.mxu0 0.0
    %808 = vmatpush.msra.mxu0 0.0
    %809 = vmatpush.msra.mxu0 0.0
    %810 = vmatpush.msra.mxu0 0.0
    %811 = vmatpush.msra.mxu0 0.0
    %812 = vmatpush.msra.mxu0 %v639
    %813 = vmatpush.msra.mxu0 %v638
    %814 = vmatpush.msra.mxu0 %v637
    %815 = vmatpush.msra.mxu0 %v636
    %816 = vmatmul.f32.gmra.mxu0 %v774
    %v817 = vpop.f32.mrf.mxu0
    %v818 = vadd.f32 0.0, %v817
    %819 = vdwg.mxu0
    %v820 = vadd.f32 %v674, %v818
    %v822 = vsel %vm649, %v557, 0
    %824 = vmatpush.msra.mxu0 0.0
    %825 = vmatpush.msra.mxu0 0.0
    %826 = vmatpush.msra.mxu0 0.0
    %827 = vmatpush.msra.mxu0 0.0
    %828 = vmatpush.msra.mxu0 0.0
    %829 = vmatpush.msra.mxu0 0.0
    %830 = vmatpush.msra.mxu0 0.0
    %831 = vmatpush.msra.mxu0 0.0
    %832 = vmatpush.msra.mxu0 0.0
    %833 = vmatpush.msra.mxu0 0.0
    %834 = vmatpush.msra.mxu0 0.0
    %835 = vmatpush.msra.mxu0 0.0
    %836 = vmatpush.msra.mxu0 %v643
    %837 = vmatpush.msra.mxu0 %v642
    %838 = vmatpush.msra.mxu0 %v641
    %839 = vmatpush.msra.mxu0 %v640
    %840 = vmatmul.f32.gmra.mxu0 %v822
    %v841 = vpop.f32.mrf.mxu0
    %v842 = vadd.f32 0.0, %v841
    %843 = vdwg.mxu0
    %v844 = vadd.f32 %v820, %v842
    %v846 = vsel %vm649, %v635, 0
    %848 = vmatpush.msra.mxu0 0.0
    %849 = vmatpush.msra.mxu0 0.0
    %850 = vmatpush.msra.mxu0 0.0
    %851 = vmatpush.msra.mxu0 0.0
    %852 = vmatpush.msra.mxu0 0.0
    %853 = vmatpush.msra.mxu0 0.0
    %854 = vmatpush.msra.mxu0 0.0
    %855 = vmatpush.msra.mxu0 0.0
    %856 = vmatpush.msra.mxu0 0.0
    %857 = vmatpush.msra.mxu0 0.0
    %858 = vmatpush.msra.mxu0 0.0
    %859 = vmatpush.msra.mxu0 0.0
    %860 = vmatpush.msra.mxu0 %v647
    %861 = vmatpush.msra.mxu0 %v646
    %862 = vmatpush.msra.mxu0 %v645
    %863 = vmatpush.msra.mxu0 %v644
    %864 = vmatmul.f32.gmra.mxu0 %v846
    %v865 = vpop.f32.mrf.mxu0
    %v866 = vadd.f32 0.0, %v865
    %867 = vdwg.mxu0
    %v868 = vadd.f32 %v844, %v866
    %vm869 = vcmp.ge.f32.partialorder %v868, 0.0
    %v870 = vmul.f32 %v868, 0.01
    %v871 = vsel %vm869, %v868, %v870
    %v872 = vld [vmem:[%s5] sm:$0xff]
    %v873 = vld [vmem:[%s5 + $0x8] sm:$0xff]
    %v874 = vld [vmem:[%s5 + $0x10] sm:$0xff]
    %v875 = vld [vmem:[%s5 + $0x18] sm:$0xff]
    %v876 = vld [vmem:[%s6] sm:$0xff]
    %v877 = vld [vmem:[%s6 + $0x8] sm:$0xff]
    %v878 = vld [vmem:[%s6 + $0x10] sm:$0xff]
    %v879 = vld [vmem:[%s6 + $0x18] sm:$0xff]
    %v880 = vld [vmem:[%s7] sm:$0x1]
    %v882 = vperm.slane %v880, 0
    %v885 = vsel %vm649, %v727, 0
    %887 = vmatpush.msra.mxu0 0.0
    %888 = vmatpush.msra.mxu0 0.0
    %889 = vmatpush.msra.mxu0 0.0
    %890 = vmatpush.msra.mxu0 0.0
    %891 = vmatpush.msra.mxu0 0.0
    %892 = vmatpush.msra.mxu0 0.0
    %893 = vmatpush.msra.mxu0 0.0
    %894 = vmatpush.msra.mxu0 0.0
    %895 = vmatpush.msra.mxu0 0.0
    %896 = vmatpush.msra.mxu0 0.0
    %897 = vmatpush.msra.mxu0 0.0
    %898 = vmatpush.msra.mxu0 0.0
    %899 = vmatpush.msra.mxu0 %v875
    %900 = vmatpush.msra.mxu0 %v874
    %901 = vmatpush.msra.mxu0 %v873
    %902 = vmatpush.msra.mxu0 %v872
    %903 = vmatmul.f32.gmra.mxu0 %v885
    %v904 = vpop.f32.mrf.mxu0
    %v905 = vadd.f32 %v882, %v904
    %906 = vdwg.mxu0
    %v908 = vsel %vm649, %v799, 0
    %910 = vmatpush.msra.mxu0 0.0
    %911 = vmatpush.msra.mxu0 0.0
    %912 = vmatpush.msra.mxu0 0.0
    %913 = vmatpush.msra.mxu0 0.0
    %914 = vmatpush.msra.mxu0 0.0
    %915 = vmatpush.msra.mxu0 0.0
    %916 = vmatpush.msra.mxu0 0.0
    %917 = vmatpush.msra.mxu0 0.0
    %918 = vmatpush.msra.mxu0 0.0
    %919 = vmatpush.msra.mxu0 0.0
    %920 = vmatpush.msra.mxu0 0.0
    %921 = vmatpush.msra.mxu0 0.0
    %922 = vmatpush.msra.mxu0 %v875
    %923 = vmatpush.msra.mxu0 %v874
    %924 = vmatpush.msra.mxu0 %v873
    %925 = vmatpush.msra.mxu0 %v872
    %926 = vmatmul.f32.gmra.mxu0 %v908
    %v927 = vpop.f32.mrf.mxu0
    %v928 = vadd.f32 %v882, %v927
    %929 = vdwg.mxu0
    %v931 = vsel %vm649, %v871, 0
    %933 = vmatpush.msra.mxu0 0.0
    %934 = vmatpush.msra.mxu0 0.0
    %935 = vmatpush.msra.mxu0 0.0
    %936 = vmatpush.msra.mxu0 0.0
    %937 = vmatpush.msra.mxu0 0.0
    %938 = vmatpush.msra.mxu0 0.0
    %939 = vmatpush.msra.mxu0 0.0
    %940 = vmatpush.msra.mxu0 0.0
    %941 = vmatpush.msra.mxu0 0.0
    %942 = vmatpush.msra.mxu0 0.0
    %943 = vmatpush.msra.mxu0 0.0
    %944 = vmatpush.msra.mxu0 0.0
    %945 = vmatpush.msra.mxu0 %v875
    %946 = vmatpush.msra.mxu0 %v874
    %947 = vmatpush.msra.mxu0 %v873
    %948 = vmatpush.msra.mxu0 %v872
    %949 = vmatmul.f32.gmra.mxu0 %v931
    %v950 = vpop.f32.mrf.mxu0
    %v951 = vadd.f32 %v882, %v950
    %952 = vdwg.mxu0
    %v954 = vsel %vm649, 0.0, 0
    %956 = vmatpush.msra.mxu0 0.0
    %957 = vmatpush.msra.mxu0 0.0
    %958 = vmatpush.msra.mxu0 0.0
    %959 = vmatpush.msra.mxu0 0.0
    %960 = vmatpush.msra.mxu0 0.0
    %961 = vmatpush.msra.mxu0 0.0
    %962 = vmatpush.msra.mxu0 0.0
    %963 = vmatpush.msra.mxu0 0.0
    %964 = vmatpush.msra.mxu0 0.0
    %965 = vmatpush.msra.mxu0 0.0
    %966 = vmatpush.msra.mxu0 0.0
    %967 = vmatpush.msra.mxu0 0.0
    %968 = vmatpush.msra.mxu0 %v879
    %969 = vmatpush.msra.mxu0 %v878
    %970 = vmatpush.msra.mxu0 %v877
    %971 = vmatpush.msra.mxu0 %v876
    %972 = vmatmul.f32.gmra.mxu0 %v954
    %v973 = vpop.f32.mrf.mxu0
    %v974 = vadd.f32 0.0, %v973
    %975 = vdwg.mxu0
    %v976 = vadd.f32 %v905, %v974
    %v977 = vxor.u32 %v976, 2147483648
    %v978 = vmul.f32 %v977, 1.442695
    %v979 = vpow.pop %v978
    %v980 = vadd.f32 %v979, 1.0
    %v981 = vrcp.pop %v980
    %v982 = vmul.f32 %v980, %v981
    %v983 = vsub.f32 1.0, %v982
    %v984 = vmul.f32 %v981, %v983
    %v985 = vadd.f32 %v981, %v984
    %vm986 = vweird.f32 %v980
    %vm987 = vweird.f32 %v981
    %vm988 = vmor %vm986, %vm987
    %v989 = vsel %vm988, %v981, %v985
    %v990 = vand.u32 2147483647, %v980
    %vm991 = vcmp.eq.f32.partialorder %v990, 8.507059e+37
    %v992 = vand.u32 %v980, 2147483648
    %v993 = vor.u32 1.1754944e-38, %v992
    %v994 = vsel %vm991, %v993, %v989
    %v995 = vmul.f32 1.0, %v994
    %v996 = vtanh.pop %v976
    %v997 = vmul.f32 %v995, 0.0
    %999 = vrot.lane.b32.xlu0 %v996, 64
    %v1000 = vpop.permute.xlu0 %999
    %v1002 = vmul.f32 %v995, %v1000
    %1004 = vrot.lane.b32.xlu0 %v1002, 32
    %v1005 = vpop.permute.xlu0 %1004
    %v1007 = vadd.f32 %v997, %v1005
    %v1008 = vtanh.pop %v1007
    %1010 = vrot.lane.b32.xlu0 %v1008, 64
    %v1011 = vpop.permute.xlu0 %1010
    %v1013 = vmul.f32 %v995, %v1011
    %1015 = vrot.lane.b32.xlu0 %v1013, 32
    %v1016 = vpop.permute.xlu0 %1015
    %v1017 = vsel %vm649, %v1016, 0
    %1019 = vmatpush.msra.mxu0 0.0
    %1020 = vmatpush.msra.mxu0 0.0
    %1021 = vmatpush.msra.mxu0 0.0
    %1022 = vmatpush.msra.mxu0 0.0
    %1023 = vmatpush.msra.mxu0 0.0
    %1024 = vmatpush.msra.mxu0 0.0
    %1025 = vmatpush.msra.mxu0 0.0
    %1026 = vmatpush.msra.mxu0 0.0
    %1027 = vmatpush.msra.mxu0 0.0
    %1028 = vmatpush.msra.mxu0 0.0
    %1029 = vmatpush.msra.mxu0 0.0
    %1030 = vmatpush.msra.mxu0 0.0
    %1031 = vmatpush.msra.mxu0 %v879
    %1032 = vmatpush.msra.mxu0 %v878
    %1033 = vmatpush.msra.mxu0 %v877
    %1034 = vmatpush.msra.mxu0 %v876
    %1035 = vmatmul.f32.gmra.mxu0 %v1017
    %v1036 = vpop.f32.mrf.mxu0
    %v1037 = vadd.f32 0.0, %v1036
    %1038 = vdwg.mxu0
    %v1039 = vadd.f32 %v928, %v1037
    %v1040 = vxor.u32 %v1039, 2147483648
    %v1041 = vmul.f32 %v1040, 1.442695
    %v1042 = vpow.pop %v1041
    %v1043 = vadd.f32 %v1042, 1.0
    %v1044 = vrcp.pop %v1043
    %v1045 = vmul.f32 %v1043, %v1044
    %v1046 = vsub.f32 1.0, %v1045
    %v1047 = vmul.f32 %v1044, %v1046
    %v1048 = vadd.f32 %v1044, %v1047
    %vm1049 = vweird.f32 %v1043
    %vm1050 = vweird.f32 %v1044
    %vm1051 = vmor %vm1049, %vm1050
    %v1052 = vsel %vm1051, %v1044, %v1048
    %v1053 = vand.u32 2147483647, %v1043
    %vm1054 = vcmp.eq.f32.partialorder %v1053, 8.507059e+37
    %v1055 = vand.u32 %v1043, 2147483648
    %v1056 = vor.u32 1.1754944e-38, %v1055
    %v1057 = vsel %vm1054, %v1056, %v1052
    %v1058 = vmul.f32 1.0, %v1057
    %v1059 = vtanh.pop %v1039
    %v1060 = vmul.f32 %v1058, %v1007
    %1062 = vrot.lane.b32.xlu0 %v1059, 64
    %v1063 = vpop.permute.xlu0 %1062
    %v1065 = vmul.f32 %v1058, %v1063
    %1067 = vrot.lane.b32.xlu0 %v1065, 32
    %v1068 = vpop.permute.xlu0 %1067
    %v1070 = vadd.f32 %v1060, %v1068
    %v1071 = vtanh.pop %v1070
    %1073 = vrot.lane.b32.xlu0 %v1071, 64
    %v1074 = vpop.permute.xlu0 %1073
    %v1076 = vmul.f32 %v1058, %v1074
    %1078 = vrot.lane.b32.xlu0 %v1076, 32
    %v1079 = vpop.permute.xlu0 %1078
    %v1080 = vsel %vm649, %v1079, 0
    %1082 = vmatpush.msra.mxu0 0.0
    %1083 = vmatpush.msra.mxu0 0.0
    %1084 = vmatpush.msra.mxu0 0.0
    %1085 = vmatpush.msra.mxu0 0.0
    %1086 = vmatpush.msra.mxu0 0.0
    %1087 = vmatpush.msra.mxu0 0.0
    %1088 = vmatpush.msra.mxu0 0.0
    %1089 = vmatpush.msra.mxu0 0.0
    %1090 = vmatpush.msra.mxu0 0.0
    %1091 = vmatpush.msra.mxu0 0.0
    %1092 = vmatpush.msra.mxu0 0.0
    %1093 = vmatpush.msra.mxu0 0.0
    %1094 = vmatpush.msra.mxu0 %v879
    %1095 = vmatpush.msra.mxu0 %v878
    %1096 = vmatpush.msra.mxu0 %v877
    %1097 = vmatpush.msra.mxu0 %v876
    %1098 = vmatmul.f32.gmra.mxu0 %v1080
    %v1099 = vpop.f32.mrf.mxu0
    %v1100 = vadd.f32 0.0, %v1099
    %1101 = vdwg.mxu0
    %v1102 = vadd.f32 %v951, %v1100
    %v1103 = vxor.u32 %v1102, 2147483648
    %v1104 = vmul.f32 %v1103, 1.442695
    %v1105 = vpow.pop %v1104
    %v1106 = vadd.f32 %v1105, 1.0
    %v1107 = vrcp.pop %v1106
    %v1108 = vmul.f32 %v1106, %v1107
    %v1109 = vsub.f32 1.0, %v1108
    %v1110 = vmul.f32 %v1107, %v1109
    %v1111 = vadd.f32 %v1107, %v1110
    %vm1112 = vweird.f32 %v1106
    %vm1113 = vweird.f32 %v1107
    %vm1114 = vmor %vm1112, %vm1113
    %v1115 = vsel %vm1114, %v1107, %v1111
    %v1116 = vand.u32 2147483647, %v1106
    %vm1117 = vcmp.eq.f32.partialorder %v1116, 8.507059e+37
    %v1118 = vand.u32 %v1106, 2147483648
    %v1119 = vor.u32 1.1754944e-38, %v1118
    %v1120 = vsel %vm1117, %v1119, %v1115
    %v1121 = vmul.f32 1.0, %v1120
    %v1122 = vtanh.pop %v1102
    %v1123 = vmul.f32 %v1121, %v1070
    %1125 = vrot.lane.b32.xlu0 %v1122, 64
    %v1126 = vpop.permute.xlu0 %1125
    %v1128 = vmul.f32 %v1121, %v1126
    %1130 = vrot.lane.b32.xlu0 %v1128, 32
    %v1131 = vpop.permute.xlu0 %1130
    %v1133 = vadd.f32 %v1123, %v1131
    %v1134 = vtanh.pop %v1133
    %1136 = vrot.lane.b32.xlu0 %v1134, 64
    %v1137 = vpop.permute.xlu0 %1136
    %v1139 = vmul.f32 %v1121, %v1137
    %v1140 = vld [vmem:[%s8] sm:$0xff]
    %v1141 = vld [vmem:[%s8 + $0x8] sm:$0xff]
    %v1142 = vld [vmem:[%s8 + $0x10] sm:$0xff]
    %v1143 = vld [vmem:[%s8 + $0x18] sm:$0xff]
    %v1144 = vld [vmem:[%s9] sm:$0x1]
    %v1146 = vperm.slane %v1144, 0
    %1149 = vrot.lane.b32.xlu0 %v1139, 32
    %v1150 = vpop.permute.xlu0 %1149
    %v1151 = vsel %vm649, %v1150, 0
    %1153 = vmatpush.msra.mxu0 0.0
    %1154 = vmatpush.msra.mxu0 0.0
    %1155 = vmatpush.msra.mxu0 0.0
    %1156 = vmatpush.msra.mxu0 0.0
    %1157 = vmatpush.msra.mxu0 0.0
    %1158 = vmatpush.msra.mxu0 0.0
    %1159 = vmatpush.msra.mxu0 0.0
    %1160 = vmatpush.msra.mxu0 0.0
    %1161 = vmatpush.msra.mxu0 0.0
    %1162 = vmatpush.msra.mxu0 0.0
    %1163 = vmatpush.msra.mxu0 0.0
    %1164 = vmatpush.msra.mxu0 0.0
    %1165 = vmatpush.msra.mxu0 %v1143
    %1166 = vmatpush.msra.mxu0 %v1142
    %1167 = vmatpush.msra.mxu0 %v1141
    %1168 = vmatpush.msra.mxu0 %v1140
    %1169 = vmatmul.f32.gmra.mxu0 %v1151
    %v1170 = vpop.f32.mrf.mxu0
    %v1171 = vadd.f32 %v1146, %v1170
    %1172 = vdwg.mxu0
    %vm1173 = vcmask 58368
    %1174 = vst.msk [vmem:[#allocation2] sm:$0x3] %vm1173, %v1171
    // Predicated region
    $region42: #{crnn_forward.1} parent=1 // pred_check
      _
    $region43: #{crnn_forward.1} parent=1 // pred_check_branch
      %1176 = sbr.rel (0) target = $region45
    $region44: #{crnn_forward.1} parent=1 // pred_region
      %1178 = vsyncadd [#allocation3], 0
      %s1180 = sshll.u32 [#allocation2], 4
      %s1181 = int_to_ptr.vmem [resolvable:$true] %s1180
      %s1182 = sshll.u32 %s10, 4
      %s1183 = int_to_ptr.hbm [resolvable:$true] %s1182
      %1185 = dma.vmem_to_hbm [thread:$0]  %s1181, 32, %s1183, [#allocation3]
    $region45: #{crnn_forward.1} parent=1 // pred_fallthru
      _
    // Predicated region
    $region46: #{crnn_forward.1} parent=1 // pred_check
      _
    $region47: #{crnn_forward.1} parent=1 // pred_check_branch
      %1187 = sbr.rel (0) target = $region49
    $region48: #{crnn_forward.1} parent=1 // pred_region
      %1189 = dma.done [#allocation3], 32
    $region49: #{crnn_forward.1} parent=1 // pred_fallthru
      _
    %1190 = vsyncpa [#allocation3], 1

</llo_original>
